<compile_context>
chip_gen: v7x
topology: tpu7x:2x2x1
jax: 0.10.0
libtpu: 0.0.40
codegen_flags: <defaults>
</compile_context>

<pallas_src>
import jax
import jax.numpy as jnp
from jax.experimental import pallas as pl
from jax.experimental.pallas import tpu as pltpu

EPS = 1e-3


def _round_up(x, m):
    return (x + m - 1) // m * m


# ----------------------------------------------------------------------------
# Pallas kernels: one row-tile of   y = relu?( x @ w + b )
#   x block : (TM, Cin) bf16   w : (Cin, Cout) bf16   b : (1, Cout) f32
# ----------------------------------------------------------------------------
def _mm_bias_relu_kernel(x_ref, w_ref, b_ref, o_ref):
    y = jnp.dot(x_ref[...], w_ref[...], preferred_element_type=jnp.float32)
    y = jnp.maximum(y + b_ref[...], 0.0)
    o_ref[...] = y.astype(o_ref.dtype)


def _mm_bias_kernel(x_ref, w_ref, b_ref, o_ref):
    y = jnp.dot(x_ref[...], w_ref[...], preferred_element_type=jnp.float32)
    o_ref[...] = (y + b_ref[...]).astype(o_ref.dtype)


def matmul_bias(x2d, w, b, *, relu, out_dtype):
    """x2d: (R, Cin); w: (Cin, Cout) bf16 (BN scale pre-folded); b: (Cout,) f32."""
    R, Cin = x2d.shape
    Cout = w.shape[1]
    TM = min(512, _round_up(max(R, 1), 8))       # row tile (multiple of 8)
    Rp = _round_up(R, TM)
    if Rp != R:
        x2d = jnp.pad(x2d, ((0, Rp - R), (0, 0)))
    kernel = _mm_bias_relu_kernel if relu else _mm_bias_kernel
    out = pl.pallas_call(
        kernel,
        out_shape=jax.ShapeDtypeStruct((Rp, Cout), out_dtype),
        grid=(Rp // TM,),
        in_specs=[
            pl.BlockSpec((TM, Cin), lambda i: (i, 0)),
            pl.BlockSpec((Cin, Cout), lambda i: (0, 0)),
            pl.BlockSpec((1, Cout), lambda i: (0, 0)),
        ],
        out_specs=pl.BlockSpec((TM, Cout), lambda i: (i, 0)),
        compiler_params=pltpu.CompilerParams(dimension_semantics=("parallel",)),
    )(x2d.astype(jnp.bfloat16), w, b.reshape(1, Cout).astype(jnp.float32))
    return out[:R] if Rp != R else out


# ---------------------------- layer wrappers ----------------------------------
def conv3x3_bn_relu(x, w2, b, stride):
    # x: (N, H, W, Cin) bf16 ; w2: (9*Cin, Cout) bf16, BN folded ; pad=1
    N, H, W, Cin = x.shape
    Cout = w2.shape[1]
    Ho = (H + 2 - 3) // stride + 1
    Wo = (W + 2 - 3) // stride + 1
    xp = jnp.pad(x, ((0, 0), (1, 1), (1, 1), (0, 0)))
    taps = []
    for kh in range(3):
        for kw in range(3):
            taps.append(xp[:, kh:kh + stride * (Ho - 1) + 1:stride,
                           kw:kw + stride * (Wo - 1) + 1:stride, :])
    patches = jnp.concatenate(taps, axis=-1)               # (N, Ho, Wo, 9*Cin)
    y = matmul_bias(patches.reshape(N * Ho * Wo, 9 * Cin), w2, b,
                    relu=True, out_dtype=jnp.bfloat16)
    return y.reshape(N, Ho, Wo, Cout)


def deconv_bn_relu(x, w2, b, s):
    # ConvTranspose2d(kernel=s, stride=s); w2: (Cin, s*s*Cout) bf16 BN-folded,
    # b: (s*s*Cout,) f32 (bias tiled over the s*s sub-pixel positions).
    N, H, W, Cin = x.shape
    Cout = w2.shape[1] // (s * s)
    y = matmul_bias(x.reshape(N * H * W, Cin), w2, b,
                    relu=True, out_dtype=jnp.bfloat16)     # (N*H*W, s*s*Cout)
    y = y.reshape(N, H, W, s, s, Cout).transpose(0, 1, 3, 2, 4, 5)
    return y.reshape(N, H * s, W * s, Cout)


# ---------------------------- parameters --------------------------------------
CFG = dict(
    layer_nums=(1, 2, 2),
    layer_strides=(2, 2, 2),
    num_filters=(32, 32, 64),
    upsample_strides=(1, 2, 4),
    num_upsample_filters=(64, 64, 64),
    num_input_features=32,
    num_anchor_per_loc=2,
    num_class=2,
    box_code_size=7,
    num_direction_bins=2,
)


def init_params(key, cfg):
    keys = iter(jax.random.split(key, 256))
    n_stage = len(cfg["layer_nums"])
    in_filters = [cfg["num_input_features"], *cfg["num_filters"][:-1]]

    def conv_w(cout, cin, k):
        return 0.05 * jax.random.normal(next(keys), (cout, cin, k, k), jnp.float32)

    def fold_bn(c):
        kg, kb = jax.random.split(next(keys))
        gamma = 1.0 + 0.1 * jax.random.normal(kg, (c,), jnp.float32)
        beta = 0.1 * jax.random.normal(kb, (c,), jnp.float32)
        mean = jnp.zeros((c,), jnp.float32)
        var = jnp.ones((c,), jnp.float32)
        scale = gamma / jnp.sqrt(var + EPS)
        bias = beta - mean * scale
        return scale, bias

    blocks, deblocks = [], []
    for i in range(n_stage):
        planes = int(cfg["num_filters"][i])
        cins = [in_filters[i]] + [planes] * int(cfg["layer_nums"][i])
        layers = []
        for cin in cins:
            w = conv_w(planes, cin, 3)                          # torch OIHW
            scale, bias = fold_bn(planes)
            wf = w * scale[:, None, None, None]                 # fold BN scale
            w2 = jnp.transpose(wf, (2, 3, 1, 0)).reshape(9 * cin, planes)
            layers.append((w2.astype(jnp.bfloat16), bias))
        blocks.append(layers)

        up = int(cfg["num_upsample_filters"][i])
        s = int(round(cfg["upsample_strides"][i]))
        w = 0.05 * jax.random.normal(next(keys), (planes, up, s, s), jnp.float32)
        scale, bias = fold_bn(up)
        wf = w * scale[None, :, None, None]
        w2 = jnp.transpose(wf, (0, 2, 3, 1)).reshape(planes, s * s * up)
        deblocks.append((w2.astype(jnp.bfloat16), jnp.tile(bias, s * s)))

    # Fused detection heads: per stage [cls | box | dir], stages concatenated along
    # Cout; input channels zero-padded to the full 192-channel concat; Cout padded
    # to a lane-dense 128.
    A = cfg["num_anchor_per_loc"]
    ncls = A * cfg["num_class"]                 # encode_background_as_zeros=True
    nbox = A * cfg["box_code_size"]
    ndir = A * cfg["num_direction_bins"]
    cin_total = sum(cfg["num_upsample_filters"])
    cols, biases = [], []
    for i in range(n_stage):
        cin_i = sum(cfg["num_upsample_filters"][:i + 1])
        for cout in (ncls, nbox, ndir):
            w = conv_w(cout, cin_i, 1)[:, :, 0, 0]              # (cout, cin_i)
            bb = 0.05 * jax.random.normal(next(keys), (cout,), jnp.float32)
            cols.append(jnp.pad(w.T, ((0, cin_total - cin_i), (0, 0))))
            biases.append(bb)
    w_head = jnp.concatenate(cols, axis=1)                      # (192, 66)
    b_head = jnp.concatenate(biases)
    pad = _round_up(w_head.shape[1], 128) - w_head.shape[1]
    w_head = jnp.pad(w_head, ((0, 0), (0, pad)))
    b_head = jnp.pad(b_head, (0, pad))
    head = (w_head.astype(jnp.bfloat16), b_head)

    return {"blocks": blocks, "deblocks": deblocks, "head": head}


# ---------------------------- forward ------------------------------------------
def rpn_forward(params, x_nchw, cfg):
    n_stage = len(cfg["layer_nums"])
    x = jnp.transpose(x_nchw, (0, 2, 3, 1)).astype(jnp.bfloat16)   # NCHW -> NHWC

    ups = []
    for i in range(n_stage):
        for j, (w2, b) in enumerate(params["blocks"][i]):
            stride = int(cfg["layer_strides"][i]) if j == 0 else 1
            x = conv3x3_bn_relu(x, w2, b, stride)
        dw, db = params["deblocks"][i]
        s = int(round(cfg["upsample_strides"][i]))
        ups.append(deconv_bn_relu(x, dw, db, s))

    # Concatenated upsampled features, built ONCE and fed to the single fused head call.
    feat = jnp.concatenate(ups, axis=-1)                           # (N, H, W, 192)
    N, H, W, _ = feat.shape
    w_head, b_head = params["head"]
    y = matmul_bias(feat.reshape(N * H * W, feat.shape[-1]), w_head, b_head,
                    relu=False, out_dtype=jnp.float32).reshape(N, H, W, -1)

    A = cfg["num_anchor_per_loc"]
    ncls, nbox, ndir = cfg["num_class"], cfg["box_code_size"], cfg["num_direction_bins"]
    per_stage = A * (ncls + nbox + ndir)

    def pick(stage, off, code):
        base = stage * per_stage + off
        t = y[..., base:base + A * code].reshape(N, H, W, A, code)
        return jnp.transpose(t, (0, 3, 1, 2, 4))                   # (N, A, H, W, code)

    all_cls = [pick(i, 0, ncls) for i in range(n_stage)]
    all_box = [pick(i, A * ncls, nbox) for i in range(n_stage)]
    all_dir = [pick(i, A * (ncls + nbox), ndir) for i in range(n_stage)]

    return {
        "box_preds": jnp.stack(all_box),
        "cls_preds": jnp.stack(all_cls),
        "dir_cls_preds": jnp.stack(all_dir),
    }


if __name__ == "__main__":
    key = jax.random.PRNGKey(0)
    kx, kp = jax.random.split(key)
    x = jax.random.normal(kx, (2, CFG["num_input_features"], 16, 16), jnp.float32)
    params = init_params(kp, CFG)

    fwd = jax.jit(lambda p, inp: rpn_forward(p, inp, CFG))
    out = jax.block_until_ready(fwd(params, x))

    assert out["cls_preds"].shape == (3, 2, 2, 8, 8, 2), out["cls_preds"].shape
    assert out["box_preds"].shape == (3, 2, 2, 8, 8, 7), out["box_preds"].shape
    assert out["dir_cls_preds"].shape == (3, 2, 2, 8, 8, 2), out["dir_cls_preds"].shape
    print("KERNEL_OK")
</pallas_src>

<mosaic_0001>
module attributes {stable_mosaic.version = 11 : i64} {
  func.func @_mm_bias_relu_kernel(%arg0: i32, %arg1: memref<128x288xbf16, #tpu.memory_space<vmem>>, %arg2: memref<288x32xbf16, #tpu.memory_space<vmem>>, %arg3: memref<1x32xf32, #tpu.memory_space<vmem>>, %arg4: memref<128x32xbf16, #tpu.memory_space<vmem>>) attributes {dimension_semantics = [#tpu.dimension_semantics<parallel>], iteration_bounds = array<i64: 1>, scalar_prefetch = 0 : i64, scratch_operands = 0 : i64, tpu.core_type = #tpu.core_type<tc>, window_params = [{transform_indices = @transform_0, window_bounds = array<i64: 128, 288>}, {pipeline_mode = #tpu.pipeline_mode<synchronous>, transform_indices = @transform_1, window_bounds = array<i64: 288, 32>}, {pipeline_mode = #tpu.pipeline_mode<synchronous>, transform_indices = @transform_2, window_bounds = array<i64: 1, 32>}, {transform_indices = @transform_3, window_bounds = array<i64: 128, 32>}]} {
    %c0 = arith.constant 0 : index
    %c0_0 = arith.constant 0 : index
    %0 = vector.load %arg1[%c0, %c0_0] : memref<128x288xbf16, #tpu.memory_space<vmem>>, vector<128x288xbf16>
    %c0_1 = arith.constant 0 : index
    %c0_2 = arith.constant 0 : index
    %1 = vector.load %arg2[%c0_1, %c0_2] : memref<288x32xbf16, #tpu.memory_space<vmem>>, vector<288x32xbf16>
    %cst = arith.constant dense<0.000000e+00> : vector<128x32xf32>
    %2 = tpu.matmul %0, %1, %cst {dimension_numbers = #tpu.dot_dimension_numbers<[1], [0], [0], [1], [0, 0, 1, 1], [], []>} : vector<128x288xbf16>, vector<288x32xbf16>, vector<128x32xf32> -> vector<128x32xf32>
    %c0_3 = arith.constant 0 : index
    %c0_4 = arith.constant 0 : index
    %3 = vector.load %arg3[%c0_3, %c0_4] : memref<1x32xf32, #tpu.memory_space<vmem>>, vector<1x32xf32>
    %4 = vector.broadcast %3 : vector<1x32xf32> to vector<128x32xf32>
    %5 = arith.addf %2, %4 : vector<128x32xf32>
    %cst_5 = arith.constant 0.000000e+00 : f32
    %6 = vector.broadcast %cst_5 : f32 to vector<128x32xf32>
    %7 = arith.maximumf %5, %6 : vector<128x32xf32>
    %8 = arith.truncf %7 : vector<128x32xf32> to vector<128x32xbf16>
    %c0_6 = arith.constant 0 : index
    %c0_7 = arith.constant 0 : index
    %9 = vector.load %arg4[%c0_6, %c0_7] : memref<128x32xbf16, #tpu.memory_space<vmem>>, vector<128x32xbf16>
    tpu.vector_store %arg4[%c0_6, %c0_7], %8 {strides = array<i32>} : memref<128x32xbf16, #tpu.memory_space<vmem>>, vector<128x32xbf16>,
    return
  }
  func.func @transform_0(%arg0: i32) -> (i32, i32) {
    %c0_i32 = arith.constant 0 : i32
    %c0_i32_0 = arith.constant 0 : i32
    return %arg0, %c0_i32 : i32, i32
  }
  func.func @transform_1(%arg0: i32) -> (i32, i32) {
    %c0_i32 = arith.constant 0 : i32
    %c0_i32_0 = arith.constant 0 : i32
    %c0_i32_1 = arith.constant 0 : i32
    return %c0_i32, %c0_i32_0 : i32, i32
  }
  func.func @transform_2(%arg0: i32) -> (i32, i32) {
    %c0_i32 = arith.constant 0 : i32
    %c0_i32_0 = arith.constant 0 : i32
    %c0_i32_1 = arith.constant 0 : i32
    return %c0_i32, %c0_i32_0 : i32, i32
  }
  func.func @transform_3(%arg0: i32) -> (i32, i32) {
    %c0_i32 = arith.constant 0 : i32
    %c0_i32_0 = arith.constant 0 : i32
    return %arg0, %c0_i32 : i32, i32
  }
}

module attributes {stable_mosaic.version = 11 : i64} {
  func.func @_mm_bias_relu_kernel(%arg0: i32, %arg1: memref<32x288xbf16, #tpu.memory_space<vmem>>, %arg2: memref<288x32xbf16, #tpu.memory_space<vmem>>, %arg3: memref<1x32xf32, #tpu.memory_space<vmem>>, %arg4: memref<32x32xbf16, #tpu.memory_space<vmem>>) attributes {dimension_semantics = [#tpu.dimension_semantics<parallel>], iteration_bounds = array<i64: 1>, scalar_prefetch = 0 : i64, scratch_operands = 0 : i64, tpu.core_type = #tpu.core_type<tc>, window_params = [{transform_indices = @transform_0, window_bounds = array<i64: 32, 288>}, {pipeline_mode = #tpu.pipeline_mode<synchronous>, transform_indices = @transform_1, window_bounds = array<i64: 288, 32>}, {pipeline_mode = #tpu.pipeline_mode<synchronous>, transform_indices = @transform_2, window_bounds = array<i64: 1, 32>}, {transform_indices = @transform_3, window_bounds = array<i64: 32, 32>}]} {
    %c0 = arith.constant 0 : index
    %c0_0 = arith.constant 0 : index
    %0 = vector.load %arg1[%c0, %c0_0] : memref<32x288xbf16, #tpu.memory_space<vmem>>, vector<32x288xbf16>
    %c0_1 = arith.constant 0 : index
    %c0_2 = arith.constant 0 : index
    %1 = vector.load %arg2[%c0_1, %c0_2] : memref<288x32xbf16, #tpu.memory_space<vmem>>, vector<288x32xbf16>
    %cst = arith.constant dense<0.000000e+00> : vector<32x32xf32>
    %2 = tpu.matmul %0, %1, %cst {dimension_numbers = #tpu.dot_dimension_numbers<[1], [0], [0], [1], [0, 0, 1, 1], [], []>} : vector<32x288xbf16>, vector<288x32xbf16>, vector<32x32xf32> -> vector<32x32xf32>
    %c0_3 = arith.constant 0 : index
    %c0_4 = arith.constant 0 : index
    %3 = vector.load %arg3[%c0_3, %c0_4] : memref<1x32xf32, #tpu.memory_space<vmem>>, vector<1x32xf32>
    %4 = vector.broadcast %3 : vector<1x32xf32> to vector<32x32xf32>
    %5 = arith.addf %2, %4 : vector<32x32xf32>
    %cst_5 = arith.constant 0.000000e+00 : f32
    %6 = vector.broadcast %cst_5 : f32 to vector<32x32xf32>
    %7 = arith.maximumf %5, %6 : vector<32x32xf32>
    %8 = arith.truncf %7 : vector<32x32xf32> to vector<32x32xbf16>
    %c0_6 = arith.constant 0 : index
    %c0_7 = arith.constant 0 : index
    %9 = vector.load %arg4[%c0_6, %c0_7] : memref<32x32xbf16, #tpu.memory_space<vmem>>, vector<32x32xbf16>
    tpu.vector_store %arg4[%c0_6, %c0_7], %8 {strides = array<i32>} : memref<32x32xbf16, #tpu.memory_space<vmem>>, vector<32x32xbf16>,
    return
  }
  func.func @transform_0(%arg0: i32) -> (i32, i32) {
    %c0_i32 = arith.constant 0 : i32
    %c0_i32_0 = arith.constant 0 : i32
    return %arg0, %c0_i32 : i32, i32
  }
  func.func @transform_1(%arg0: i32) -> (i32, i32) {
    %c0_i32 = arith.constant 0 : i32
    %c0_i32_0 = arith.constant 0 : i32
    %c0_i32_1 = arith.constant 0 : i32
    return %c0_i32, %c0_i32_0 : i32, i32
  }
  func.func @transform_2(%arg0: i32) -> (i32, i32) {
    %c0_i32 = arith.constant 0 : i32
    %c0_i32_0 = arith.constant 0 : i32
    %c0_i32_1 = arith.constant 0 : i32
    return %c0_i32, %c0_i32_0 : i32, i32
  }
  func.func @transform_3(%arg0: i32) -> (i32, i32) {
    %c0_i32 = arith.constant 0 : i32
    %c0_i32_0 = arith.constant 0 : i32
    return %arg0, %c0_i32 : i32, i32
  }
}

module attributes {stable_mosaic.version = 11 : i64} {
  func.func @_mm_bias_relu_kernel(%arg0: i32, %arg1: memref<8x288xbf16, #tpu.memory_space<vmem>>, %arg2: memref<288x64xbf16, #tpu.memory_space<vmem>>, %arg3: memref<1x64xf32, #tpu.memory_space<vmem>>, %arg4: memref<8x64xbf16, #tpu.memory_space<vmem>>) attributes {dimension_semantics = [#tpu.dimension_semantics<parallel>], iteration_bounds = array<i64: 1>, scalar_prefetch = 0 : i64, scratch_operands = 0 : i64, tpu.core_type = #tpu.core_type<tc>, window_params = [{transform_indices = @transform_0, window_bounds = array<i64: 8, 288>}, {pipeline_mode = #tpu.pipeline_mode<synchronous>, transform_indices = @transform_1, window_bounds = array<i64: 288, 64>}, {pipeline_mode = #tpu.pipeline_mode<synchronous>, transform_indices = @transform_2, window_bounds = array<i64: 1, 64>}, {transform_indices = @transform_3, window_bounds = array<i64: 8, 64>}]} {
    %c0 = arith.constant 0 : index
    %c0_0 = arith.constant 0 : index
    %0 = vector.load %arg1[%c0, %c0_0] : memref<8x288xbf16, #tpu.memory_space<vmem>>, vector<8x288xbf16>
    %c0_1 = arith.constant 0 : index
    %c0_2 = arith.constant 0 : index
    %1 = vector.load %arg2[%c0_1, %c0_2] : memref<288x64xbf16, #tpu.memory_space<vmem>>, vector<288x64xbf16>
    %cst = arith.constant dense<0.000000e+00> : vector<8x64xf32>
    %2 = tpu.matmul %0, %1, %cst {dimension_numbers = #tpu.dot_dimension_numbers<[1], [0], [0], [1], [0, 0, 1, 1], [], []>} : vector<8x288xbf16>, vector<288x64xbf16>, vector<8x64xf32> -> vector<8x64xf32>
    %c0_3 = arith.constant 0 : index
    %c0_4 = arith.constant 0 : index
    %3 = vector.load %arg3[%c0_3, %c0_4] : memref<1x64xf32, #tpu.memory_space<vmem>>, vector<1x64xf32>
    %4 = vector.broadcast %3 : vector<1x64xf32> to vector<8x64xf32>
    %5 = arith.addf %2, %4 : vector<8x64xf32>
    %cst_5 = arith.constant 0.000000e+00 : f32
    %6 = vector.broadcast %cst_5 : f32 to vector<8x64xf32>
    %7 = arith.maximumf %5, %6 : vector<8x64xf32>
    %8 = arith.truncf %7 : vector<8x64xf32> to vector<8x64xbf16>
    %c0_6 = arith.constant 0 : index
    %c0_7 = arith.constant 0 : index
    %9 = vector.load %arg4[%c0_6, %c0_7] : memref<8x64xbf16, #tpu.memory_space<vmem>>, vector<8x64xbf16>
    tpu.vector_store %arg4[%c0_6, %c0_7], %8 {strides = array<i32>} : memref<8x64xbf16, #tpu.memory_space<vmem>>, vector<8x64xbf16>,
    return
  }
  func.func @transform_0(%arg0: i32) -> (i32, i32) {
    %c0_i32 = arith.constant 0 : i32
    %c0_i32_0 = arith.constant 0 : i32
    return %arg0, %c0_i32 : i32, i32
  }
  func.func @transform_1(%arg0: i32) -> (i32, i32) {
    %c0_i32 = arith.constant 0 : i32
    %c0_i32_0 = arith.constant 0 : i32
    %c0_i32_1 = arith.constant 0 : i32
    return %c0_i32, %c0_i32_0 : i32, i32
  }
  func.func @transform_2(%arg0: i32) -> (i32, i32) {
    %c0_i32 = arith.constant 0 : i32
    %c0_i32_0 = arith.constant 0 : i32
    %c0_i32_1 = arith.constant 0 : i32
    return %c0_i32, %c0_i32_0 : i32, i32
  }
  func.func @transform_3(%arg0: i32) -> (i32, i32) {
    %c0_i32 = arith.constant 0 : i32
    %c0_i32_0 = arith.constant 0 : i32
    return %arg0, %c0_i32 : i32, i32
  }
}

module attributes {stable_mosaic.version = 11 : i64} {
  func.func @_mm_bias_relu_kernel(%arg0: i32, %arg1: memref<8x576xbf16, #tpu.memory_space<vmem>>, %arg2: memref<576x64xbf16, #tpu.memory_space<vmem>>, %arg3: memref<1x64xf32, #tpu.memory_space<vmem>>, %arg4: memref<8x64xbf16, #tpu.memory_space<vmem>>) attributes {dimension_semantics = [#tpu.dimension_semantics<parallel>], iteration_bounds = array<i64: 1>, scalar_prefetch = 0 : i64, scratch_operands = 0 : i64, tpu.core_type = #tpu.core_type<tc>, window_params = [{transform_indices = @transform_0, window_bounds = array<i64: 8, 576>}, {pipeline_mode = #tpu.pipeline_mode<synchronous>, transform_indices = @transform_1, window_bounds = array<i64: 576, 64>}, {pipeline_mode = #tpu.pipeline_mode<synchronous>, transform_indices = @transform_2, window_bounds = array<i64: 1, 64>}, {transform_indices = @transform_3, window_bounds = array<i64: 8, 64>}]} {
    %c0 = arith.constant 0 : index
    %c0_0 = arith.constant 0 : index
    %0 = vector.load %arg1[%c0, %c0_0] : memref<8x576xbf16, #tpu.memory_space<vmem>>, vector<8x576xbf16>
    %c0_1 = arith.constant 0 : index
    %c0_2 = arith.constant 0 : index
    %1 = vector.load %arg2[%c0_1, %c0_2] : memref<576x64xbf16, #tpu.memory_space<vmem>>, vector<576x64xbf16>
    %cst = arith.constant dense<0.000000e+00> : vector<8x64xf32>
    %2 = tpu.matmul %0, %1, %cst {dimension_numbers = #tpu.dot_dimension_numbers<[1], [0], [0], [1], [0, 0, 1, 1], [], []>} : vector<8x576xbf16>, vector<576x64xbf16>, vector<8x64xf32> -> vector<8x64xf32>
    %c0_3 = arith.constant 0 : index
    %c0_4 = arith.constant 0 : index
    %3 = vector.load %arg3[%c0_3, %c0_4] : memref<1x64xf32, #tpu.memory_space<vmem>>, vector<1x64xf32>
    %4 = vector.broadcast %3 : vector<1x64xf32> to vector<8x64xf32>
    %5 = arith.addf %2, %4 : vector<8x64xf32>
    %cst_5 = arith.constant 0.000000e+00 : f32
    %6 = vector.broadcast %cst_5 : f32 to vector<8x64xf32>
    %7 = arith.maximumf %5, %6 : vector<8x64xf32>
    %8 = arith.truncf %7 : vector<8x64xf32> to vector<8x64xbf16>
    %c0_6 = arith.constant 0 : index
    %c0_7 = arith.constant 0 : index
    %9 = vector.load %arg4[%c0_6, %c0_7] : memref<8x64xbf16, #tpu.memory_space<vmem>>, vector<8x64xbf16>
    tpu.vector_store %arg4[%c0_6, %c0_7], %8 {strides = array<i32>} : memref<8x64xbf16, #tpu.memory_space<vmem>>, vector<8x64xbf16>,
    return
  }
  func.func @transform_0(%arg0: i32) -> (i32, i32) {
    %c0_i32 = arith.constant 0 : i32
    %c0_i32_0 = arith.constant 0 : i32
    return %arg0, %c0_i32 : i32, i32
  }
  func.func @transform_1(%arg0: i32) -> (i32, i32) {
    %c0_i32 = arith.constant 0 : i32
    %c0_i32_0 = arith.constant 0 : i32
    %c0_i32_1 = arith.constant 0 : i32
    return %c0_i32, %c0_i32_0 : i32, i32
  }
  func.func @transform_2(%arg0: i32) -> (i32, i32) {
    %c0_i32 = arith.constant 0 : i32
    %c0_i32_0 = arith.constant 0 : i32
    %c0_i32_1 = arith.constant 0 : i32
    return %c0_i32, %c0_i32_0 : i32, i32
  }
  func.func @transform_3(%arg0: i32) -> (i32, i32) {
    %c0_i32 = arith.constant 0 : i32
    %c0_i32_0 = arith.constant 0 : i32
    return %arg0, %c0_i32 : i32, i32
  }
}

module attributes {stable_mosaic.version = 11 : i64} {
  func.func @_mm_bias_relu_kernel(%arg0: i32, %arg1: memref<8x64xbf16, #tpu.memory_space<vmem>>, %arg2: memref<64x1024xbf16, #tpu.memory_space<vmem>>, %arg3: memref<1x1024xf32, #tpu.memory_space<vmem>>, %arg4: memref<8x1024xbf16, #tpu.memory_space<vmem>>) attributes {dimension_semantics = [#tpu.dimension_semantics<parallel>], iteration_bounds = array<i64: 1>, scalar_prefetch = 0 : i64, scratch_operands = 0 : i64, tpu.core_type = #tpu.core_type<tc>, window_params = [{transform_indices = @transform_0, window_bounds = array<i64: 8, 64>}, {pipeline_mode = #tpu.pipeline_mode<synchronous>, transform_indices = @transform_1, window_bounds = array<i64: 64, 1024>}, {pipeline_mode = #tpu.pipeline_mode<synchronous>, transform_indices = @transform_2, window_bounds = array<i64: 1, 1024>}, {transform_indices = @transform_3, window_bounds = array<i64: 8, 1024>}]} {
    %c0 = arith.constant 0 : index
    %c0_0 = arith.constant 0 : index
    %0 = vector.load %arg1[%c0, %c0_0] : memref<8x64xbf16, #tpu.memory_space<vmem>>, vector<8x64xbf16>
    %c0_1 = arith.constant 0 : index
    %c0_2 = arith.constant 0 : index
    %1 = vector.load %arg2[%c0_1, %c0_2] : memref<64x1024xbf16, #tpu.memory_space<vmem>>, vector<64x1024xbf16>
    %cst = arith.constant dense<0.000000e+00> : vector<8x1024xf32>
    %2 = tpu.matmul %0, %1, %cst {dimension_numbers = #tpu.dot_dimension_numbers<[1], [0], [0], [1], [0, 0, 1, 1], [], []>} : vector<8x64xbf16>, vector<64x1024xbf16>, vector<8x1024xf32> -> vector<8x1024xf32>
    %c0_3 = arith.constant 0 : index
    %c0_4 = arith.constant 0 : index
    %3 = vector.load %arg3[%c0_3, %c0_4] : memref<1x1024xf32, #tpu.memory_space<vmem>>, vector<1x1024xf32>
    %4 = vector.broadcast %3 : vector<1x1024xf32> to vector<8x1024xf32>
    %5 = arith.addf %2, %4 : vector<8x1024xf32>
    %cst_5 = arith.constant 0.000000e+00 : f32
    %6 = vector.broadcast %cst_5 : f32 to vector<8x1024xf32>
    %7 = arith.maximumf %5, %6 : vector<8x1024xf32>
    %8 = arith.truncf %7 : vector<8x1024xf32> to vector<8x1024xbf16>
    %c0_6 = arith.constant 0 : index
    %c0_7 = arith.constant 0 : index
    %9 = vector.load %arg4[%c0_6, %c0_7] : memref<8x1024xbf16, #tpu.memory_space<vmem>>, vector<8x1024xbf16>
    tpu.vector_store %arg4[%c0_6, %c0_7], %8 {strides = array<i32>} : memref<8x1024xbf16, #tpu.memory_space<vmem>>, vector<8x1024xbf16>,
    return
  }
  func.func @transform_0(%arg0: i32) -> (i32, i32) {
    %c0_i32 = arith.constant 0 : i32
    %c0_i32_0 = arith.constant 0 : i32
    return %arg0, %c0_i32 : i32, i32
  }
  func.func @transform_1(%arg0: i32) -> (i32, i32) {
    %c0_i32 = arith.constant 0 : i32
    %c0_i32_0 = arith.constant 0 : i32
    %c0_i32_1 = arith.constant 0 : i32
    return %c0_i32, %c0_i32_0 : i32, i32
  }
  func.func @transform_2(%arg0: i32) -> (i32, i32) {
    %c0_i32 = arith.constant 0 : i32
    %c0_i32_0 = arith.constant 0 : i32
    %c0_i32_1 = arith.constant 0 : i32
    return %c0_i32, %c0_i32_0 : i32, i32
  }
  func.func @transform_3(%arg0: i32) -> (i32, i32) {
    %c0_i32 = arith.constant 0 : i32
    %c0_i32_0 = arith.constant 0 : i32
    return %arg0, %c0_i32 : i32, i32
  }
}

module attributes {stable_mosaic.version = 11 : i64} {
  func.func @_mm_bias_relu_kernel(%arg0: i32, %arg1: memref<32x32xbf16, #tpu.memory_space<vmem>>, %arg2: memref<32x256xbf16, #tpu.memory_space<vmem>>, %arg3: memref<1x256xf32, #tpu.memory_space<vmem>>, %arg4: memref<32x256xbf16, #tpu.memory_space<vmem>>) attributes {dimension_semantics = [#tpu.dimension_semantics<parallel>], iteration_bounds = array<i64: 1>, scalar_prefetch = 0 : i64, scratch_operands = 0 : i64, tpu.core_type = #tpu.core_type<tc>, window_params = [{transform_indices = @transform_0, window_bounds = array<i64: 32, 32>}, {pipeline_mode = #tpu.pipeline_mode<synchronous>, transform_indices = @transform_1, window_bounds = array<i64: 32, 256>}, {pipeline_mode = #tpu.pipeline_mode<synchronous>, transform_indices = @transform_2, window_bounds = array<i64: 1, 256>}, {transform_indices = @transform_3, window_bounds = array<i64: 32, 256>}]} {
    %c0 = arith.constant 0 : index
    %c0_0 = arith.constant 0 : index
    %0 = vector.load %arg1[%c0, %c0_0] : memref<32x32xbf16, #tpu.memory_space<vmem>>, vector<32x32xbf16>
    %c0_1 = arith.constant 0 : index
    %c0_2 = arith.constant 0 : index
    %1 = vector.load %arg2[%c0_1, %c0_2] : memref<32x256xbf16, #tpu.memory_space<vmem>>, vector<32x256xbf16>
    %cst = arith.constant dense<0.000000e+00> : vector<32x256xf32>
    %2 = tpu.matmul %0, %1, %cst {dimension_numbers = #tpu.dot_dimension_numbers<[1], [0], [0], [1], [0, 0, 1, 1], [], []>} : vector<32x32xbf16>, vector<32x256xbf16>, vector<32x256xf32> -> vector<32x256xf32>
    %c0_3 = arith.constant 0 : index
    %c0_4 = arith.constant 0 : index
    %3 = vector.load %arg3[%c0_3, %c0_4] : memref<1x256xf32, #tpu.memory_space<vmem>>, vector<1x256xf32>
    %4 = vector.broadcast %3 : vector<1x256xf32> to vector<32x256xf32>
    %5 = arith.addf %2, %4 : vector<32x256xf32>
    %cst_5 = arith.constant 0.000000e+00 : f32
    %6 = vector.broadcast %cst_5 : f32 to vector<32x256xf32>
    %7 = arith.maximumf %5, %6 : vector<32x256xf32>
    %8 = arith.truncf %7 : vector<32x256xf32> to vector<32x256xbf16>
    %c0_6 = arith.constant 0 : index
    %c0_7 = arith.constant 0 : index
    %9 = vector.load %arg4[%c0_6, %c0_7] : memref<32x256xbf16, #tpu.memory_space<vmem>>, vector<32x256xbf16>
    tpu.vector_store %arg4[%c0_6, %c0_7], %8 {strides = array<i32>} : memref<32x256xbf16, #tpu.memory_space<vmem>>, vector<32x256xbf16>,
    return
  }
  func.func @transform_0(%arg0: i32) -> (i32, i32) {
    %c0_i32 = arith.constant 0 : i32
    %c0_i32_0 = arith.constant 0 : i32
    return %arg0, %c0_i32 : i32, i32
  }
  func.func @transform_1(%arg0: i32) -> (i32, i32) {
    %c0_i32 = arith.constant 0 : i32
    %c0_i32_0 = arith.constant 0 : i32
    %c0_i32_1 = arith.constant 0 : i32
    return %c0_i32, %c0_i32_0 : i32, i32
  }
  func.func @transform_2(%arg0: i32) -> (i32, i32) {
    %c0_i32 = arith.constant 0 : i32
    %c0_i32_0 = arith.constant 0 : i32
    %c0_i32_1 = arith.constant 0 : i32
    return %c0_i32, %c0_i32_0 : i32, i32
  }
  func.func @transform_3(%arg0: i32) -> (i32, i32) {
    %c0_i32 = arith.constant 0 : i32
    %c0_i32_0 = arith.constant 0 : i32
    return %arg0, %c0_i32 : i32, i32
  }
}

module attributes {stable_mosaic.version = 11 : i64} {
  func.func @_mm_bias_relu_kernel(%arg0: i32, %arg1: memref<128x32xbf16, #tpu.memory_space<vmem>>, %arg2: memref<32x64xbf16, #tpu.memory_space<vmem>>, %arg3: memref<1x64xf32, #tpu.memory_space<vmem>>, %arg4: memref<128x64xbf16, #tpu.memory_space<vmem>>) attributes {dimension_semantics = [#tpu.dimension_semantics<parallel>], iteration_bounds = array<i64: 1>, scalar_prefetch = 0 : i64, scratch_operands = 0 : i64, tpu.core_type = #tpu.core_type<tc>, window_params = [{transform_indices = @transform_0, window_bounds = array<i64: 128, 32>}, {pipeline_mode = #tpu.pipeline_mode<synchronous>, transform_indices = @transform_1, window_bounds = array<i64: 32, 64>}, {pipeline_mode = #tpu.pipeline_mode<synchronous>, transform_indices = @transform_2, window_bounds = array<i64: 1, 64>}, {transform_indices = @transform_3, window_bounds = array<i64: 128, 64>}]} {
    %c0 = arith.constant 0 : index
    %c0_0 = arith.constant 0 : index
    %0 = vector.load %arg1[%c0, %c0_0] : memref<128x32xbf16, #tpu.memory_space<vmem>>, vector<128x32xbf16>
    %c0_1 = arith.constant 0 : index
    %c0_2 = arith.constant 0 : index
    %1 = vector.load %arg2[%c0_1, %c0_2] : memref<32x64xbf16, #tpu.memory_space<vmem>>, vector<32x64xbf16>
    %cst = arith.constant dense<0.000000e+00> : vector<128x64xf32>
    %2 = tpu.matmul %0, %1, %cst {dimension_numbers = #tpu.dot_dimension_numbers<[1], [0], [0], [1], [0, 0, 1, 1], [], []>} : vector<128x32xbf16>, vector<32x64xbf16>, vector<128x64xf32> -> vector<128x64xf32>
    %c0_3 = arith.constant 0 : index
    %c0_4 = arith.constant 0 : index
    %3 = vector.load %arg3[%c0_3, %c0_4] : memref<1x64xf32, #tpu.memory_space<vmem>>, vector<1x64xf32>
    %4 = vector.broadcast %3 : vector<1x64xf32> to vector<128x64xf32>
    %5 = arith.addf %2, %4 : vector<128x64xf32>
    %cst_5 = arith.constant 0.000000e+00 : f32
    %6 = vector.broadcast %cst_5 : f32 to vector<128x64xf32>
    %7 = arith.maximumf %5, %6 : vector<128x64xf32>
    %8 = arith.truncf %7 : vector<128x64xf32> to vector<128x64xbf16>
    %c0_6 = arith.constant 0 : index
    %c0_7 = arith.constant 0 : index
    %9 = vector.load %arg4[%c0_6, %c0_7] : memref<128x64xbf16, #tpu.memory_space<vmem>>, vector<128x64xbf16>
    tpu.vector_store %arg4[%c0_6, %c0_7], %8 {strides = array<i32>} : memref<128x64xbf16, #tpu.memory_space<vmem>>, vector<128x64xbf16>,
    return
  }
  func.func @transform_0(%arg0: i32) -> (i32, i32) {
    %c0_i32 = arith.constant 0 : i32
    %c0_i32_0 = arith.constant 0 : i32
    return %arg0, %c0_i32 : i32, i32
  }
  func.func @transform_1(%arg0: i32) -> (i32, i32) {
    %c0_i32 = arith.constant 0 : i32
    %c0_i32_0 = arith.constant 0 : i32
    %c0_i32_1 = arith.constant 0 : i32
    return %c0_i32, %c0_i32_0 : i32, i32
  }
  func.func @transform_2(%arg0: i32) -> (i32, i32) {
    %c0_i32 = arith.constant 0 : i32
    %c0_i32_0 = arith.constant 0 : i32
    %c0_i32_1 = arith.constant 0 : i32
    return %c0_i32, %c0_i32_0 : i32, i32
  }
  func.func @transform_3(%arg0: i32) -> (i32, i32) {
    %c0_i32 = arith.constant 0 : i32
    %c0_i32_0 = arith.constant 0 : i32
    return %arg0, %c0_i32 : i32, i32
  }
}

module attributes {stable_mosaic.version = 11 : i64} {
  func.func @_mm_bias_kernel(%arg0: i32, %arg1: memref<128x192xbf16, #tpu.memory_space<vmem>>, %arg2: memref<192x128xbf16, #tpu.memory_space<vmem>>, %arg3: memref<1x128xf32, #tpu.memory_space<vmem>>, %arg4: memref<128x128xf32, #tpu.memory_space<vmem>>) attributes {dimension_semantics = [#tpu.dimension_semantics<parallel>], iteration_bounds = array<i64: 1>, scalar_prefetch = 0 : i64, scratch_operands = 0 : i64, tpu.core_type = #tpu.core_type<tc>, window_params = [{transform_indices = @transform_0, window_bounds = array<i64: 128, 192>}, {pipeline_mode = #tpu.pipeline_mode<synchronous>, transform_indices = @transform_1, window_bounds = array<i64: 192, 128>}, {pipeline_mode = #tpu.pipeline_mode<synchronous>, transform_indices = @transform_2, window_bounds = array<i64: 1, 128>}, {transform_indices = @transform_3, window_bounds = array<i64: 128, 128>}]} {
    %c0 = arith.constant 0 : index
    %c0_0 = arith.constant 0 : index
    %0 = vector.load %arg1[%c0, %c0_0] : memref<128x192xbf16, #tpu.memory_space<vmem>>, vector<128x192xbf16>
    %c0_1 = arith.constant 0 : index
    %c0_2 = arith.constant 0 : index
    %1 = vector.load %arg2[%c0_1, %c0_2] : memref<192x128xbf16, #tpu.memory_space<vmem>>, vector<192x128xbf16>
    %cst = arith.constant dense<0.000000e+00> : vector<128x128xf32>
    %2 = tpu.matmul %0, %1, %cst {dimension_numbers = #tpu.dot_dimension_numbers<[1], [0], [0], [1], [0, 0, 1, 1], [], []>} : vector<128x192xbf16>, vector<192x128xbf16>, vector<128x128xf32> -> vector<128x128xf32>
    %c0_3 = arith.constant 0 : index
    %c0_4 = arith.constant 0 : index
    %3 = vector.load %arg3[%c0_3, %c0_4] : memref<1x128xf32, #tpu.memory_space<vmem>>, vector<1x128xf32>
    %4 = vector.broadcast %3 : vector<1x128xf32> to vector<128x128xf32>
    %5 = arith.addf %2, %4 : vector<128x128xf32>
    %c0_5 = arith.constant 0 : index
    %c0_6 = arith.constant 0 : index
    %6 = vector.load %arg4[%c0_5, %c0_6] : memref<128x128xf32, #tpu.memory_space<vmem>>, vector<128x128xf32>
    tpu.vector_store %arg4[%c0_5, %c0_6], %5 {strides = array<i32>} : memref<128x128xf32, #tpu.memory_space<vmem>>, vector<128x128xf32>,
    return
  }
  func.func @transform_0(%arg0: i32) -> (i32, i32) {
    %c0_i32 = arith.constant 0 : i32
    %c0_i32_0 = arith.constant 0 : i32
    return %arg0, %c0_i32 : i32, i32
  }
  func.func @transform_1(%arg0: i32) -> (i32, i32) {
    %c0_i32 = arith.constant 0 : i32
    %c0_i32_0 = arith.constant 0 : i32
    %c0_i32_1 = arith.constant 0 : i32
    return %c0_i32, %c0_i32_0 : i32, i32
  }
  func.func @transform_2(%arg0: i32) -> (i32, i32) {
    %c0_i32 = arith.constant 0 : i32
    %c0_i32_0 = arith.constant 0 : i32
    %c0_i32_1 = arith.constant 0 : i32
    return %c0_i32, %c0_i32_0 : i32, i32
  }
  func.func @transform_3(%arg0: i32) -> (i32, i32) {
    %c0_i32 = arith.constant 0 : i32
    %c0_i32_0 = arith.constant 0 : i32
    return %arg0, %c0_i32 : i32, i32
  }
}

</mosaic_0001>

<llo_original>
// kernel: _lambda_.12
$region0: #{_lambda_.12}
  #allocation0 [shape = 'u32[]', space=smem, size = 0x4, offset = 0x4, fixed_abs, tag = 'smem constant byte address 0x4 - core index']
  #allocation1 [shape = 'u32[144,128]{1,0:T(1,128)}', space=vmem, size = 0x12000, scoped, tag = 'internal scratch']
  %s0 = inlined_call_operand.vmem [shape: bf16[128,288], index: 0, kind: input, shape index: {}]
  %s1 = inlined_call_operand.vmem [shape: bf16[288,32], index: 1, kind: input, shape index: {}]
  %s2 = inlined_call_operand.vmem [shape: f32[1,32], index: 2, kind: input, shape index: {}]
  %s3 = inlined_call_operand.vmem [shape: bf16[128,32], index: 3, kind: output, shape index: {}]
  %s4 = sld [smem:[#allocation0]]
  $region22: #{_lambda_.12} parent=0
    _
  %s6 = ssub.s32 1, %s4
  %s7 = scalar_select 0, %s6, %s4
  // Predicated region
  $region2: #{_lambda_.12} parent=0 // pred_check
    _
  $region3: #{_lambda_.12} parent=0 // pred_check_branch
    %9 = sbr.rel (0) target = $region5
  $region4: #{_lambda_.12} parent=0 // pred_region
    _
  $region5: #{_lambda_.12} parent=0 // pred_fallthru
    _
  // Predicated region
  $region6: #{_lambda_.12} parent=0 // pred_check
    _
  $region7: #{_lambda_.12} parent=0 // pred_check_branch
    %11 = sbr.rel (0) target = $region9
  $region8: #{_lambda_.12} parent=0 // pred_region
    _
  $region9: #{_lambda_.12} parent=0 // pred_fallthru
    _
  // Predicated region
  $region10: #{_lambda_.12} parent=0 // pred_check
    _
  $region11: #{_lambda_.12} parent=0 // pred_check_branch
    %13 = sbr.rel (0) target = $region13
  $region12: #{_lambda_.12} parent=0 // pred_region
    _
  $region13: #{_lambda_.12} parent=0 // pred_fallthru
    _
  %v15 = vld [vmem:[%s0] sm:$0xff]
  %v16 = vld [vmem:[%s0 + $0x8] sm:$0xf]
  %v17 = vld [vmem:[%s0 + $0xc] sm:$0xff]
  %v18 = vld [vmem:[%s0 + $0x14] sm:$0xf]
  %v19 = vld [vmem:[%s0 + $0x18] sm:$0xff]
  %v20 = vld [vmem:[%s0 + $0x20] sm:$0xf]
  %v21 = vld [vmem:[%s0 + $0x24] sm:$0xff]
  %v22 = vld [vmem:[%s0 + $0x2c] sm:$0xf]
  %v23 = vld [vmem:[%s0 + $0x30] sm:$0xff]
  %v24 = vld [vmem:[%s0 + $0x38] sm:$0xf]
  %v25 = vld [vmem:[%s0 + $0x3c] sm:$0xff]
  %v26 = vld [vmem:[%s0 + $0x44] sm:$0xf]
  %v27 = vld [vmem:[%s0 + $0x48] sm:$0xff]
  %v28 = vld [vmem:[%s0 + $0x50] sm:$0xf]
  %v29 = vld [vmem:[%s0 + $0x54] sm:$0xff]
  %v30 = vld [vmem:[%s0 + $0x5c] sm:$0xf]
  %v31 = vld [vmem:[%s0 + $0x60] sm:$0xff]
  %v32 = vld [vmem:[%s0 + $0x68] sm:$0xf]
  %v33 = vld [vmem:[%s0 + $0x6c] sm:$0xff]
  %v34 = vld [vmem:[%s0 + $0x74] sm:$0xf]
  %v35 = vld [vmem:[%s0 + $0x78] sm:$0xff]
  %v36 = vld [vmem:[%s0 + $0x80] sm:$0xf]
  %v37 = vld [vmem:[%s0 + $0x84] sm:$0xff]
  %v38 = vld [vmem:[%s0 + $0x8c] sm:$0xf]
  %v39 = vld [vmem:[%s0 + $0x90] sm:$0xff]
  %v40 = vld [vmem:[%s0 + $0x98] sm:$0xf]
  %v41 = vld [vmem:[%s0 + $0x9c] sm:$0xff]
  %v42 = vld [vmem:[%s0 + $0xa4] sm:$0xf]
  %v43 = vld [vmem:[%s0 + $0xa8] sm:$0xff]
  %v44 = vld [vmem:[%s0 + $0xb0] sm:$0xf]
  %v45 = vld [vmem:[%s0 + $0xb4] sm:$0xff]
  %v46 = vld [vmem:[%s0 + $0xbc] sm:$0xf]
  %v47 = vld [vmem:[%s1] sm:$0xf]
  %v48 = vld [vmem:[%s1 + $0x4] sm:$0xf]
  %v49 = vld [vmem:[%s1 + $0x8] sm:$0xf]
  %v50 = vld [vmem:[%s1 + $0xc] sm:$0xf]
  %v51 = vld [vmem:[%s1 + $0x10] sm:$0xf]
  %v52 = vld [vmem:[%s1 + $0x14] sm:$0xf]
  %v53 = vld [vmem:[%s1 + $0x18] sm:$0xf]
  %v54 = vld [vmem:[%s1 + $0x1c] sm:$0xf]
  %v55 = vld [vmem:[%s1 + $0x20] sm:$0xf]
  %v56 = vld [vmem:[%s1 + $0x24] sm:$0xf]
  %v57 = vld [vmem:[%s1 + $0x28] sm:$0xf]
  %v58 = vld [vmem:[%s1 + $0x2c] sm:$0xf]
  %v59 = vld [vmem:[%s1 + $0x30] sm:$0xf]
  %v60 = vld [vmem:[%s1 + $0x34] sm:$0xf]
  %v61 = vld [vmem:[%s1 + $0x38] sm:$0xf]
  %v62 = vld [vmem:[%s1 + $0x3c] sm:$0xf]
  %v63 = vld [vmem:[%s1 + $0x40] sm:$0xf]
  %v64 = vld [vmem:[%s1 + $0x44] sm:$0xf]
  %v65 = vld [vmem:[%s1 + $0x48] sm:$0xf]
  %v66 = vld [vmem:[%s1 + $0x4c] sm:$0xf]
  %v67 = vld [vmem:[%s1 + $0x50] sm:$0xf]
  %v68 = vld [vmem:[%s1 + $0x54] sm:$0xf]
  %v69 = vld [vmem:[%s1 + $0x58] sm:$0xf]
  %v70 = vld [vmem:[%s1 + $0x5c] sm:$0xf]
  %v71 = vld [vmem:[%s1 + $0x60] sm:$0xf]
  %v72 = vld [vmem:[%s1 + $0x64] sm:$0xf]
  %v73 = vld [vmem:[%s1 + $0x68] sm:$0xf]
  %v74 = vld [vmem:[%s1 + $0x6c] sm:$0xf]
  %v75 = vld [vmem:[%s1 + $0x70] sm:$0xf]
  %v76 = vld [vmem:[%s1 + $0x74] sm:$0xf]
  %v77 = vld [vmem:[%s1 + $0x78] sm:$0xf]
  %v78 = vld [vmem:[%s1 + $0x7c] sm:$0xf]
  %v79 = vld [vmem:[%s1 + $0x80] sm:$0xf]
  %v80 = vld [vmem:[%s1 + $0x84] sm:$0xf]
  %v81 = vld [vmem:[%s1 + $0x88] sm:$0xf]
  %v82 = vld [vmem:[%s1 + $0x8c] sm:$0xf]
  %v83 = vld [vmem:[%s2] sm:$0x1]
  %v85 = vlaneseq
  %v86 = vshrl.u32 %v85, 7
  %v87 = vsub.s32 0, %v86
  %v88 = vrot.slane %v83, %v87
  %v122 = vunpack.c.l.b16 %v15
  %v123 = vunpack.c.h.b16 %v15
  %v124 = vunpack.c.l.b16 %v16
  %v125 = vunpack.c.l.b16 %v17
  %v126 = vunpack.c.h.b16 %v17
  %v127 = vunpack.c.l.b16 %v18
  %v128 = vunpack.c.l.b16 %v19
  %v129 = vunpack.c.h.b16 %v19
  %v130 = vunpack.c.l.b16 %v20
  %v131 = vunpack.c.l.b16 %v21
  %v132 = vunpack.c.h.b16 %v21
  %v133 = vunpack.c.l.b16 %v22
  %v134 = vunpack.c.l.b16 %v23
  %v135 = vunpack.c.h.b16 %v23
  %v136 = vunpack.c.l.b16 %v24
  %v137 = vunpack.c.l.b16 %v25
  %v138 = vunpack.c.h.b16 %v25
  %v139 = vunpack.c.l.b16 %v26
  %v140 = vunpack.c.l.b16 %v27
  %v141 = vunpack.c.h.b16 %v27
  %v142 = vunpack.c.l.b16 %v28
  %v143 = vunpack.c.l.b16 %v29
  %v144 = vunpack.c.h.b16 %v29
  %v145 = vunpack.c.l.b16 %v30
  %v146 = vunpack.c.l.b16 %v31
  %v147 = vunpack.c.h.b16 %v31
  %v148 = vunpack.c.l.b16 %v32
  %v149 = vunpack.c.l.b16 %v33
  %v150 = vunpack.c.h.b16 %v33
  %v151 = vunpack.c.l.b16 %v34
  %v152 = vunpack.c.l.b16 %v35
  %v153 = vunpack.c.h.b16 %v35
  %v154 = vunpack.c.l.b16 %v36
  %v155 = vunpack.c.l.b16 %v37
  %v156 = vunpack.c.h.b16 %v37
  %v157 = vunpack.c.l.b16 %v38
  %v158 = vunpack.c.l.b16 %v39
  %v159 = vunpack.c.h.b16 %v39
  %v160 = vunpack.c.l.b16 %v40
  %v161 = vunpack.c.l.b16 %v41
  %v162 = vunpack.c.h.b16 %v41
  %v163 = vunpack.c.l.b16 %v42
  %v164 = vunpack.c.l.b16 %v43
  %v165 = vunpack.c.h.b16 %v43
  %v166 = vunpack.c.l.b16 %v44
  %v167 = vunpack.c.l.b16 %v45
  %v168 = vunpack.c.h.b16 %v45
  %v169 = vunpack.c.l.b16 %v46
  %v170 = vpack.c.b16 %v125, %v122
  %v171 = vpack.c.b16 %v126, %v123
  %v172 = vpack.c.b16 %v127, %v124
  %v173 = vpack.c.b16 %v131, %v128
  %v174 = vpack.c.b16 %v132, %v129
  %v175 = vpack.c.b16 %v133, %v130
  %v176 = vpack.c.b16 %v137, %v134
  %v177 = vpack.c.b16 %v138, %v135
  %v178 = vpack.c.b16 %v139, %v136
  %v179 = vpack.c.b16 %v143, %v140
  %v180 = vpack.c.b16 %v144, %v141
  %v181 = vpack.c.b16 %v145, %v142
  %v182 = vpack.c.b16 %v149, %v146
  %v183 = vpack.c.b16 %v150, %v147
  %v184 = vpack.c.b16 %v151, %v148
  %v185 = vpack.c.b16 %v155, %v152
  %v186 = vpack.c.b16 %v156, %v153
  %v187 = vpack.c.b16 %v157, %v154
  %v188 = vpack.c.b16 %v161, %v158
  %v189 = vpack.c.b16 %v162, %v159
  %v190 = vpack.c.b16 %v163, %v160
  %v191 = vpack.c.b16 %v167, %v164
  %v192 = vpack.c.b16 %v168, %v165
  %v193 = vpack.c.b16 %v169, %v166
  %v246 = vunpack.c.l.b16 %v47
  %v247 = vunpack.c.l.b16 %v48
  %v248 = vunpack.c.l.b16 %v49
  %v249 = vunpack.c.l.b16 %v50
  %v250 = vunpack.c.l.b16 %v51
  %v251 = vunpack.c.l.b16 %v52
  %v252 = vunpack.c.l.b16 %v53
  %v253 = vunpack.c.l.b16 %v54
  %v254 = vunpack.c.l.b16 %v55
  %v255 = vunpack.c.l.b16 %v56
  %v256 = vunpack.c.l.b16 %v57
  %v257 = vunpack.c.l.b16 %v58
  %v258 = vunpack.c.l.b16 %v59
  %v259 = vunpack.c.l.b16 %v60
  %v260 = vunpack.c.l.b16 %v61
  %v261 = vunpack.c.l.b16 %v62
  %v262 = vunpack.c.l.b16 %v63
  %v263 = vunpack.c.l.b16 %v64
  %v264 = vunpack.c.l.b16 %v65
  %v265 = vunpack.c.l.b16 %v66
  %v266 = vunpack.c.l.b16 %v67
  %v267 = vunpack.c.l.b16 %v68
  %v268 = vunpack.c.l.b16 %v69
  %v269 = vunpack.c.l.b16 %v70
  %v270 = vunpack.c.l.b16 %v71
  %v271 = vunpack.c.l.b16 %v72
  %v272 = vunpack.c.l.b16 %v73
  %v273 = vunpack.c.l.b16 %v74
  %v274 = vunpack.c.l.b16 %v75
  %v275 = vunpack.c.l.b16 %v76
  %v276 = vunpack.c.l.b16 %v77
  %v277 = vunpack.c.l.b16 %v78
  %v278 = vunpack.c.l.b16 %v79
  %v279 = vunpack.c.l.b16 %v80
  %v280 = vunpack.c.l.b16 %v81
  %v281 = vunpack.c.l.b16 %v82
  %v282 = vpack.c.b16 %v247, %v246
  %v283 = vpack.c.b16 %v249, %v248
  %v284 = vpack.c.b16 %v251, %v250
  %v285 = vpack.c.b16 %v253, %v252
  %v286 = vpack.c.b16 %v255, %v254
  %v287 = vpack.c.b16 %v257, %v256
  %v288 = vpack.c.b16 %v259, %v258
  %v289 = vpack.c.b16 %v261, %v260
  %v290 = vpack.c.b16 %v263, %v262
  %v291 = vpack.c.b16 %v265, %v264
  %v292 = vpack.c.b16 %v267, %v266
  %v293 = vpack.c.b16 %v269, %v268
  %v294 = vpack.c.b16 %v271, %v270
  %v295 = vpack.c.b16 %v273, %v272
  %v296 = vpack.c.b16 %v275, %v274
  %v297 = vpack.c.b16 %v277, %v276
  %v298 = vpack.c.b16 %v279, %v278
  %v299 = vpack.c.b16 %v281, %v280
  %vm318 = vcmask 261120
  %v320 = vsel %vm318, %v172, 0
  %v323 = vsel %vm318, %v175, 0
  %v326 = vsel %vm318, %v178, 0
  %v329 = vsel %vm318, %v181, 0
  %v332 = vsel %vm318, %v184, 0
  %v335 = vsel %vm318, %v187, 0
  %v338 = vsel %vm318, %v190, 0
  %v341 = vsel %vm318, %v193, 0
  %343 = vmatprep.subr.bf16.mxu0 0
  %344 = vmatpush1.bf16.msra.mxu0 %v282
  %345 = vmatprep.subr.bf16.mxu0 0
  %346 = vmatpush1.bf16.msra.mxu0 %v283
  %347 = vmatprep.subr.bf16.mxu0 0
  %348 = vmatpush1.bf16.msra.mxu0 %v284
  %349 = vmatprep.subr.bf16.mxu0 0
  %350 = vmatpush1.bf16.msra.mxu0 %v285
  %351 = vmatprep.subr.bf16.mxu0 0
  %352 = vmatpush1.bf16.msra.mxu0 %v286
  %353 = vmatprep.subr.bf16.mxu0 0
  %354 = vmatpush1.bf16.msra.mxu0 %v287
  %355 = vmatprep.subr.bf16.mxu0 0
  %356 = vmatpush1.bf16.msra.mxu0 %v288
  %357 = vmatprep.subr.bf16.mxu0 0
  %358 = vmatpush1.bf16.msra.mxu0 %v289
  %359 = vmatprep.subr.bf16.mxu0 0
  %360 = vmatpush1.bf16.msra.mxu0 %v290
  %361 = vmatprep.subr.bf16.mxu0 0
  %362 = vmatpush1.bf16.msra.mxu0 %v291
  %363 = vmatprep.subr.bf16.mxu0 0
  %364 = vmatpush1.bf16.msra.mxu0 %v292
  %365 = vmatprep.subr.bf16.mxu0 0
  %366 = vmatpush1.bf16.msra.mxu0 %v293
  %367 = vmatprep.subr.bf16.mxu0 0
  %368 = vmatpush1.bf16.msra.mxu0 %v294
  %369 = vmatprep.subr.bf16.mxu0 0
  %370 = vmatpush1.bf16.msra.mxu0 %v295
  %371 = vmatprep.subr.bf16.mxu0 0
  %372 = vmatpush1.bf16.msra.mxu0 %v296
  %373 = vmatprep.subr.bf16.mxu0 0
  %374 = vmatpush1.bf16.msra.mxu0 %v297
  %375 = vmatprep.mubr.bf16.mxu0 %v171
  %376 = vmatmul.mubr.bf16.gmra.mrb[0].mxu0 %v170
  %v377 = vpop.f32.mrb[0].mxu0
  %v378 = vadd.f32 %v88, %v377
  %v379 = vpop.f32.mrb[0].mxu0
  %v380 = vpop.f32.mrb[0].mxu0
  %v381 = vadd.f32 %v88, %v380
  %v382 = vpop.f32.mrb[0].mxu0
  %383 = vmatprep.mubr.bf16.mxu0 %v174
  %384 = vmatmul.mubr.bf16.gmra.mrb[0].mxu0 %v173
  %v385 = vpop.f32.mrb[0].mxu0
  %v386 = vadd.f32 %v88, %v385
  %v387 = vpop.f32.mrb[0].mxu0
  %v388 = vpop.f32.mrb[0].mxu0
  %v389 = vadd.f32 %v88, %v388
  %v390 = vpop.f32.mrb[0].mxu0
  %391 = vmatprep.mubr.bf16.mxu0 %v177
  %392 = vmatmul.mubr.bf16.gmra.mrb[0].mxu0 %v176
  %v393 = vpop.f32.mrb[0].mxu0
  %v394 = vadd.f32 %v88, %v393
  %v395 = vpop.f32.mrb[0].mxu0
  %v396 = vpop.f32.mrb[0].mxu0
  %v397 = vadd.f32 %v88, %v396
  %v398 = vpop.f32.mrb[0].mxu0
  %399 = vmatprep.mubr.bf16.mxu0 %v180
  %400 = vmatmul.mubr.bf16.gmra.mrb[0].mxu0 %v179
  %v401 = vpop.f32.mrb[0].mxu0
  %v402 = vadd.f32 %v88, %v401
  %v403 = vpop.f32.mrb[0].mxu0
  %v404 = vpop.f32.mrb[0].mxu0
  %v405 = vadd.f32 %v88, %v404
  %v406 = vpop.f32.mrb[0].mxu0
  %407 = vmatprep.mubr.bf16.mxu0 %v183
  %408 = vmatmul.mubr.bf16.gmra.mrb[0].mxu0 %v182
  %v409 = vpop.f32.mrb[0].mxu0
  %v410 = vadd.f32 %v88, %v409
  %v411 = vpop.f32.mrb[0].mxu0
  %v412 = vpop.f32.mrb[0].mxu0
  %v413 = vadd.f32 %v88, %v412
  %v414 = vpop.f32.mrb[0].mxu0
  %415 = vmatprep.mubr.bf16.mxu0 %v186
  %416 = vmatmul.mubr.bf16.gmra.mrb[0].mxu0 %v185
  %v417 = vpop.f32.mrb[0].mxu0
  %v418 = vadd.f32 %v88, %v417
  %v419 = vpop.f32.mrb[0].mxu0
  %v420 = vpop.f32.mrb[0].mxu0
  %v421 = vadd.f32 %v88, %v420
  %v422 = vpop.f32.mrb[0].mxu0
  %423 = vmatprep.mubr.bf16.mxu0 %v189
  %424 = vmatmul.mubr.bf16.gmra.mrb[0].mxu0 %v188
  %v425 = vpop.f32.mrb[0].mxu0
  %v426 = vadd.f32 %v88, %v425
  %v427 = vpop.f32.mrb[0].mxu0
  %v428 = vpop.f32.mrb[0].mxu0
  %v429 = vadd.f32 %v88, %v428
  %v430 = vpop.f32.mrb[0].mxu0
  %431 = vmatprep.mubr.bf16.mxu0 %v192
  %432 = vmatmul.mubr.bf16.gmra.mrb[0].mxu0 %v191
  %v433 = vpop.f32.mrb[0].mxu0
  %v434 = vadd.f32 %v88, %v433
  %v435 = vpop.f32.mrb[0].mxu0
  %v436 = vpop.f32.mrb[0].mxu0
  %v437 = vadd.f32 %v88, %v436
  %v438 = vpop.f32.mrb[0].mxu0
  %439 = vdwg.mxu0
  %440 = vmatprep.subr.bf16.mxu0 0
  %441 = vmatpush1.bf16.msra.mxu0 %v298
  %442 = vmatprep.subr.bf16.mxu0 0
  %443 = vmatpush1.bf16.msra.mxu0 %v299
  %444 = vmatprep.subr.bf16.mxu0 0
  %445 = vmatpush1.bf16.msra.mxu0 0
  %446 = vmatprep.subr.bf16.mxu0 0
  %447 = vmatpush1.bf16.msra.mxu0 0
  %448 = vmatprep.subr.bf16.mxu0 0
  %449 = vmatpush1.bf16.msra.mxu0 0
  %450 = vmatprep.subr.bf16.mxu0 0
  %451 = vmatpush1.bf16.msra.mxu0 0
  %452 = vmatprep.subr.bf16.mxu0 0
  %453 = vmatpush1.bf16.msra.mxu0 0
  %454 = vmatprep.subr.bf16.mxu0 0
  %455 = vmatpush1.bf16.msra.mxu0 0
  %456 = vmatprep.subr.bf16.mxu0 0
  %457 = vmatpush1.bf16.msra.mxu0 0
  %458 = vmatprep.subr.bf16.mxu0 0
  %459 = vmatpush1.bf16.msra.mxu0 0
  %460 = vmatprep.subr.bf16.mxu0 0
  %461 = vmatpush1.bf16.msra.mxu0 0
  %462 = vmatprep.subr.bf16.mxu0 0
  %463 = vmatpush1.bf16.msra.mxu0 0
  %464 = vmatprep.subr.bf16.mxu0 0
  %465 = vmatpush1.bf16.msra.mxu0 0
  %466 = vmatprep.subr.bf16.mxu0 0
  %467 = vmatpush1.bf16.msra.mxu0 0
  %468 = vmatprep.subr.bf16.mxu0 0
  %469 = vmatpush1.bf16.msra.mxu0 0
  %470 = vmatprep.subr.bf16.mxu0 0
  %471 = vmatpush1.bf16.msra.mxu0 0
  %472 = vmatprep.mubr.bf16.mxu0 0
  %473 = vmatmul.mubr.bf16.gmra.mrb[0].mxu0 %v320
  %v474 = vpop.f32.mrb[0].mxu0
  %v475 = vadd.f32 %v378, %v474
  %v476 = vpop.f32.mrb[0].mxu0
  %v477 = vpop.f32.mrb[0].mxu0
  %v478 = vadd.f32 %v381, %v477
  %v479 = vpop.f32.mrb[0].mxu0
  %480 = vmatprep.mubr.bf16.mxu0 0
  %481 = vmatmul.mubr.bf16.gmra.mrb[0].mxu0 %v323
  %v482 = vpop.f32.mrb[0].mxu0
  %v483 = vadd.f32 %v386, %v482
  %v484 = vpop.f32.mrb[0].mxu0
  %v485 = vpop.f32.mrb[0].mxu0
  %v486 = vadd.f32 %v389, %v485
  %v487 = vpop.f32.mrb[0].mxu0
  %488 = vmatprep.mubr.bf16.mxu0 0
  %489 = vmatmul.mubr.bf16.gmra.mrb[0].mxu0 %v326
  %v490 = vpop.f32.mrb[0].mxu0
  %v491 = vadd.f32 %v394, %v490
  %v492 = vpop.f32.mrb[0].mxu0
  %v493 = vpop.f32.mrb[0].mxu0
  %v494 = vadd.f32 %v397, %v493
  %v495 = vpop.f32.mrb[0].mxu0
  %496 = vmatprep.mubr.bf16.mxu0 0
  %497 = vmatmul.mubr.bf16.gmra.mrb[0].mxu0 %v329
  %v498 = vpop.f32.mrb[0].mxu0
  %v499 = vadd.f32 %v402, %v498
  %v500 = vpop.f32.mrb[0].mxu0
  %v501 = vpop.f32.mrb[0].mxu0
  %v502 = vadd.f32 %v405, %v501
  %v503 = vpop.f32.mrb[0].mxu0
  %504 = vmatprep.mubr.bf16.mxu0 0
  %505 = vmatmul.mubr.bf16.gmra.mrb[0].mxu0 %v332
  %v506 = vpop.f32.mrb[0].mxu0
  %v507 = vadd.f32 %v410, %v506
  %v508 = vpop.f32.mrb[0].mxu0
  %v509 = vpop.f32.mrb[0].mxu0
  %v510 = vadd.f32 %v413, %v509
  %v511 = vpop.f32.mrb[0].mxu0
  %512 = vmatprep.mubr.bf16.mxu0 0
  %513 = vmatmul.mubr.bf16.gmra.mrb[0].mxu0 %v335
  %v514 = vpop.f32.mrb[0].mxu0
  %v515 = vadd.f32 %v418, %v514
  %v516 = vpop.f32.mrb[0].mxu0
  %v517 = vpop.f32.mrb[0].mxu0
  %v518 = vadd.f32 %v421, %v517
  %v519 = vpop.f32.mrb[0].mxu0
  %520 = vmatprep.mubr.bf16.mxu0 0
  %521 = vmatmul.mubr.bf16.gmra.mrb[0].mxu0 %v338
  %v522 = vpop.f32.mrb[0].mxu0
  %v523 = vadd.f32 %v426, %v522
  %v524 = vpop.f32.mrb[0].mxu0
  %v525 = vpop.f32.mrb[0].mxu0
  %v526 = vadd.f32 %v429, %v525
  %v527 = vpop.f32.mrb[0].mxu0
  %528 = vmatprep.mubr.bf16.mxu0 0
  %529 = vmatmul.mubr.bf16.gmra.mrb[0].mxu0 %v341
  %v530 = vpop.f32.mrb[0].mxu0
  %v531 = vadd.f32 %v434, %v530
  %v532 = vpop.f32.mrb[0].mxu0
  %v533 = vpop.f32.mrb[0].mxu0
  %v534 = vadd.f32 %v437, %v533
  %v535 = vpop.f32.mrb[0].mxu0
  %536 = vdwg.mxu0
  %v537 = vmax.f32 %v475, 0.0
  %v538 = vmax.f32 %v478, 0.0
  %v539 = vmax.f32 %v483, 0.0
  %v540 = vmax.f32 %v486, 0.0
  %v541 = vmax.f32 %v491, 0.0
  %v542 = vmax.f32 %v494, 0.0
  %v543 = vmax.f32 %v499, 0.0
  %v544 = vmax.f32 %v502, 0.0
  %v545 = vmax.f32 %v507, 0.0
  %v546 = vmax.f32 %v510, 0.0
  %v547 = vmax.f32 %v515, 0.0
  %v548 = vmax.f32 %v518, 0.0
  %v549 = vmax.f32 %v523, 0.0
  %v550 = vmax.f32 %v526, 0.0
  %v551 = vmax.f32 %v531, 0.0
  %v552 = vmax.f32 %v534, 0.0
  %v553 = vpack.c.bf16 %v538, %v537
  %v554 = vpack.c.bf16 %v540, %v539
  %v555 = vpack.c.bf16 %v542, %v541
  %v556 = vpack.c.bf16 %v544, %v543
  %v557 = vpack.c.bf16 %v546, %v545
  %v558 = vpack.c.bf16 %v548, %v547
  %v559 = vpack.c.bf16 %v550, %v549
  %v560 = vpack.c.bf16 %v552, %v551
  %v569 = vunpack.c.l.b16 %v553
  %v570 = vunpack.c.h.b16 %v553
  %v571 = vunpack.c.l.b16 %v554
  %v572 = vunpack.c.h.b16 %v554
  %v573 = vunpack.c.l.b16 %v555
  %v574 = vunpack.c.h.b16 %v555
  %v575 = vunpack.c.l.b16 %v556
  %v576 = vunpack.c.h.b16 %v556
  %v577 = vunpack.c.l.b16 %v557
  %v578 = vunpack.c.h.b16 %v557
  %v579 = vunpack.c.l.b16 %v558
  %v580 = vunpack.c.h.b16 %v558
  %v581 = vunpack.c.l.b16 %v559
  %v582 = vunpack.c.h.b16 %v559
  %v583 = vunpack.c.l.b16 %v560
  %v584 = vunpack.c.h.b16 %v560
  %v585 = vpack.c.b16 %v569, %v569
  %v586 = vpack.c.b16 %v570, %v570
  %v587 = vpack.c.b16 %v571, %v571
  %v588 = vpack.c.b16 %v572, %v572
  %v589 = vpack.c.b16 %v573, %v573
  %v590 = vpack.c.b16 %v574, %v574
  %v591 = vpack.c.b16 %v575, %v575
  %v592 = vpack.c.b16 %v576, %v576
  %v593 = vpack.c.b16 %v577, %v577
  %v594 = vpack.c.b16 %v578, %v578
  %v595 = vpack.c.b16 %v579, %v579
  %v596 = vpack.c.b16 %v580, %v580
  %v597 = vpack.c.b16 %v581, %v581
  %v598 = vpack.c.b16 %v582, %v582
  %v599 = vpack.c.b16 %v583, %v583
  %v600 = vpack.c.b16 %v584, %v584
  %vm617 = vcmask 257024
  %618 = vst.msk [vmem:[%s3] sm:$0xf] %vm617, %v585
  %619 = vst.msk [vmem:[%s3 + $0x4] sm:$0xf] %vm617, %v586
  %620 = vst.msk [vmem:[%s3 + $0x8] sm:$0xf] %vm617, %v587
  %621 = vst.msk [vmem:[%s3 + $0xc] sm:$0xf] %vm617, %v588
  %622 = vst.msk [vmem:[%s3 + $0x10] sm:$0xf] %vm617, %v589
  %623 = vst.msk [vmem:[%s3 + $0x14] sm:$0xf] %vm617, %v590
  %624 = vst.msk [vmem:[%s3 + $0x18] sm:$0xf] %vm617, %v591
  %625 = vst.msk [vmem:[%s3 + $0x1c] sm:$0xf] %vm617, %v592
  %626 = vst.msk [vmem:[%s3 + $0x20] sm:$0xf] %vm617, %v593
  %627 = vst.msk [vmem:[%s3 + $0x24] sm:$0xf] %vm617, %v594
  %628 = vst.msk [vmem:[%s3 + $0x28] sm:$0xf] %vm617, %v595
  %629 = vst.msk [vmem:[%s3 + $0x2c] sm:$0xf] %vm617, %v596
  %630 = vst.msk [vmem:[%s3 + $0x30] sm:$0xf] %vm617, %v597
  %631 = vst.msk [vmem:[%s3 + $0x34] sm:$0xf] %vm617, %v598
  %632 = vst.msk [vmem:[%s3 + $0x38] sm:$0xf] %vm617, %v599
  %633 = vst.msk [vmem:[%s3 + $0x3c] sm:$0xf] %vm617, %v600
  // Predicated region
  $region14: #{_lambda_.12} parent=0 // pred_check
    _
  $region15: #{_lambda_.12} parent=0 // pred_check_branch
    %635 = sbr.rel (0) target = $region17
  $region16: #{_lambda_.12} parent=0 // pred_region
    _
  $region17: #{_lambda_.12} parent=0 // pred_fallthru
    _
  // Predicated region
  $region18: #{_lambda_.12} parent=0 // pred_check
    _
  $region19: #{_lambda_.12} parent=0 // pred_check_branch
    %637 = sbr.rel (0) target = $region21
  $region20: #{_lambda_.12} parent=0 // pred_region
    _
  $region21: #{_lambda_.12} parent=0 // pred_fallthru
    _

// kernel: _lambda_.15
$region0: #{_lambda_.15}
  #allocation0 [shape = 'u32[]', space=smem, size = 0x4, offset = 0x4, fixed_abs, tag = 'smem constant byte address 0x4 - core index']
  #allocation1 [shape = 'u32[144,128]{1,0:T(1,128)}', space=vmem, size = 0x12000, scoped, tag = 'internal scratch']
  %s0 = inlined_call_operand.vmem [shape: bf16[32,288], index: 0, kind: input, shape index: {}]
  %s1 = inlined_call_operand.vmem [shape: bf16[288,32], index: 1, kind: input, shape index: {}]
  %s2 = inlined_call_operand.vmem [shape: f32[1,32], index: 2, kind: input, shape index: {}]
  %s3 = inlined_call_operand.vmem [shape: bf16[32,32], index: 3, kind: output, shape index: {}]
  %s4 = sld [smem:[#allocation0]]
  $region22: #{_lambda_.15} parent=0
    _
  %s6 = ssub.s32 1, %s4
  %s7 = scalar_select 0, %s6, %s4
  // Predicated region
  $region2: #{_lambda_.15} parent=0 // pred_check
    _
  $region3: #{_lambda_.15} parent=0 // pred_check_branch
    %9 = sbr.rel (0) target = $region5
  $region4: #{_lambda_.15} parent=0 // pred_region
    _
  $region5: #{_lambda_.15} parent=0 // pred_fallthru
    _
  // Predicated region
  $region6: #{_lambda_.15} parent=0 // pred_check
    _
  $region7: #{_lambda_.15} parent=0 // pred_check_branch
    %11 = sbr.rel (0) target = $region9
  $region8: #{_lambda_.15} parent=0 // pred_region
    _
  $region9: #{_lambda_.15} parent=0 // pred_fallthru
    _
  // Predicated region
  $region10: #{_lambda_.15} parent=0 // pred_check
    _
  $region11: #{_lambda_.15} parent=0 // pred_check_branch
    %13 = sbr.rel (0) target = $region13
  $region12: #{_lambda_.15} parent=0 // pred_region
    _
  $region13: #{_lambda_.15} parent=0 // pred_fallthru
    _
  %v15 = vld [vmem:[%s0] sm:$0xff]
  %v16 = vld [vmem:[%s0 + $0x8] sm:$0xf]
  %v17 = vld [vmem:[%s0 + $0xc] sm:$0xff]
  %v18 = vld [vmem:[%s0 + $0x14] sm:$0xf]
  %v19 = vld [vmem:[%s0 + $0x18] sm:$0xff]
  %v20 = vld [vmem:[%s0 + $0x20] sm:$0xf]
  %v21 = vld [vmem:[%s0 + $0x24] sm:$0xff]
  %v22 = vld [vmem:[%s0 + $0x2c] sm:$0xf]
  %v23 = vld [vmem:[%s1] sm:$0xf]
  %v24 = vld [vmem:[%s1 + $0x4] sm:$0xf]
  %v25 = vld [vmem:[%s1 + $0x8] sm:$0xf]
  %v26 = vld [vmem:[%s1 + $0xc] sm:$0xf]
  %v27 = vld [vmem:[%s1 + $0x10] sm:$0xf]
  %v28 = vld [vmem:[%s1 + $0x14] sm:$0xf]
  %v29 = vld [vmem:[%s1 + $0x18] sm:$0xf]
  %v30 = vld [vmem:[%s1 + $0x1c] sm:$0xf]
  %v31 = vld [vmem:[%s1 + $0x20] sm:$0xf]
  %v32 = vld [vmem:[%s1 + $0x24] sm:$0xf]
  %v33 = vld [vmem:[%s1 + $0x28] sm:$0xf]
  %v34 = vld [vmem:[%s1 + $0x2c] sm:$0xf]
  %v35 = vld [vmem:[%s1 + $0x30] sm:$0xf]
  %v36 = vld [vmem:[%s1 + $0x34] sm:$0xf]
  %v37 = vld [vmem:[%s1 + $0x38] sm:$0xf]
  %v38 = vld [vmem:[%s1 + $0x3c] sm:$0xf]
  %v39 = vld [vmem:[%s1 + $0x40] sm:$0xf]
  %v40 = vld [vmem:[%s1 + $0x44] sm:$0xf]
  %v41 = vld [vmem:[%s1 + $0x48] sm:$0xf]
  %v42 = vld [vmem:[%s1 + $0x4c] sm:$0xf]
  %v43 = vld [vmem:[%s1 + $0x50] sm:$0xf]
  %v44 = vld [vmem:[%s1 + $0x54] sm:$0xf]
  %v45 = vld [vmem:[%s1 + $0x58] sm:$0xf]
  %v46 = vld [vmem:[%s1 + $0x5c] sm:$0xf]
  %v47 = vld [vmem:[%s1 + $0x60] sm:$0xf]
  %v48 = vld [vmem:[%s1 + $0x64] sm:$0xf]
  %v49 = vld [vmem:[%s1 + $0x68] sm:$0xf]
  %v50 = vld [vmem:[%s1 + $0x6c] sm:$0xf]
  %v51 = vld [vmem:[%s1 + $0x70] sm:$0xf]
  %v52 = vld [vmem:[%s1 + $0x74] sm:$0xf]
  %v53 = vld [vmem:[%s1 + $0x78] sm:$0xf]
  %v54 = vld [vmem:[%s1 + $0x7c] sm:$0xf]
  %v55 = vld [vmem:[%s1 + $0x80] sm:$0xf]
  %v56 = vld [vmem:[%s1 + $0x84] sm:$0xf]
  %v57 = vld [vmem:[%s1 + $0x88] sm:$0xf]
  %v58 = vld [vmem:[%s1 + $0x8c] sm:$0xf]
  %v59 = vld [vmem:[%s2] sm:$0x1]
  %v61 = vlaneseq
  %v62 = vshrl.u32 %v61, 7
  %v63 = vsub.s32 0, %v62
  %v64 = vrot.slane %v59, %v63
  %v74 = vunpack.c.l.b16 %v15
  %v75 = vunpack.c.h.b16 %v15
  %v76 = vunpack.c.l.b16 %v16
  %v77 = vunpack.c.l.b16 %v17
  %v78 = vunpack.c.h.b16 %v17
  %v79 = vunpack.c.l.b16 %v18
  %v80 = vunpack.c.l.b16 %v19
  %v81 = vunpack.c.h.b16 %v19
  %v82 = vunpack.c.l.b16 %v20
  %v83 = vunpack.c.l.b16 %v21
  %v84 = vunpack.c.h.b16 %v21
  %v85 = vunpack.c.l.b16 %v22
  %v86 = vpack.c.b16 %v77, %v74
  %v87 = vpack.c.b16 %v78, %v75
  %v88 = vpack.c.b16 %v79, %v76
  %v89 = vpack.c.b16 %v83, %v80
  %v90 = vpack.c.b16 %v84, %v81
  %v91 = vpack.c.b16 %v85, %v82
  %v132 = vunpack.c.l.b16 %v23
  %v133 = vunpack.c.l.b16 %v24
  %v134 = vunpack.c.l.b16 %v25
  %v135 = vunpack.c.l.b16 %v26
  %v136 = vunpack.c.l.b16 %v27
  %v137 = vunpack.c.l.b16 %v28
  %v138 = vunpack.c.l.b16 %v29
  %v139 = vunpack.c.l.b16 %v30
  %v140 = vunpack.c.l.b16 %v31
  %v141 = vunpack.c.l.b16 %v32
  %v142 = vunpack.c.l.b16 %v33
  %v143 = vunpack.c.l.b16 %v34
  %v144 = vunpack.c.l.b16 %v35
  %v145 = vunpack.c.l.b16 %v36
  %v146 = vunpack.c.l.b16 %v37
  %v147 = vunpack.c.l.b16 %v38
  %v148 = vunpack.c.l.b16 %v39
  %v149 = vunpack.c.l.b16 %v40
  %v150 = vunpack.c.l.b16 %v41
  %v151 = vunpack.c.l.b16 %v42
  %v152 = vunpack.c.l.b16 %v43
  %v153 = vunpack.c.l.b16 %v44
  %v154 = vunpack.c.l.b16 %v45
  %v155 = vunpack.c.l.b16 %v46
  %v156 = vunpack.c.l.b16 %v47
  %v157 = vunpack.c.l.b16 %v48
  %v158 = vunpack.c.l.b16 %v49
  %v159 = vunpack.c.l.b16 %v50
  %v160 = vunpack.c.l.b16 %v51
  %v161 = vunpack.c.l.b16 %v52
  %v162 = vunpack.c.l.b16 %v53
  %v163 = vunpack.c.l.b16 %v54
  %v164 = vunpack.c.l.b16 %v55
  %v165 = vunpack.c.l.b16 %v56
  %v166 = vunpack.c.l.b16 %v57
  %v167 = vunpack.c.l.b16 %v58
  %v168 = vpack.c.b16 %v133, %v132
  %v169 = vpack.c.b16 %v135, %v134
  %v170 = vpack.c.b16 %v137, %v136
  %v171 = vpack.c.b16 %v139, %v138
  %v172 = vpack.c.b16 %v141, %v140
  %v173 = vpack.c.b16 %v143, %v142
  %v174 = vpack.c.b16 %v145, %v144
  %v175 = vpack.c.b16 %v147, %v146
  %v176 = vpack.c.b16 %v149, %v148
  %v177 = vpack.c.b16 %v151, %v150
  %v178 = vpack.c.b16 %v153, %v152
  %v179 = vpack.c.b16 %v155, %v154
  %v180 = vpack.c.b16 %v157, %v156
  %v181 = vpack.c.b16 %v159, %v158
  %v182 = vpack.c.b16 %v161, %v160
  %v183 = vpack.c.b16 %v163, %v162
  %v184 = vpack.c.b16 %v165, %v164
  %v185 = vpack.c.b16 %v167, %v166
  %vm204 = vcmask 261120
  %v206 = vsel %vm204, %v88, 0
  %v209 = vsel %vm204, %v91, 0
  %211 = vmatprep.subr.bf16.mxu0 0
  %212 = vmatpush1.bf16.msra.mxu0 %v168
  %213 = vmatprep.subr.bf16.mxu0 0
  %214 = vmatpush1.bf16.msra.mxu0 %v169
  %215 = vmatprep.subr.bf16.mxu0 0
  %216 = vmatpush1.bf16.msra.mxu0 %v170
  %217 = vmatprep.subr.bf16.mxu0 0
  %218 = vmatpush1.bf16.msra.mxu0 %v171
  %219 = vmatprep.subr.bf16.mxu0 0
  %220 = vmatpush1.bf16.msra.mxu0 %v172
  %221 = vmatprep.subr.bf16.mxu0 0
  %222 = vmatpush1.bf16.msra.mxu0 %v173
  %223 = vmatprep.subr.bf16.mxu0 0
  %224 = vmatpush1.bf16.msra.mxu0 %v174
  %225 = vmatprep.subr.bf16.mxu0 0
  %226 = vmatpush1.bf16.msra.mxu0 %v175
  %227 = vmatprep.subr.bf16.mxu0 0
  %228 = vmatpush1.bf16.msra.mxu0 %v176
  %229 = vmatprep.subr.bf16.mxu0 0
  %230 = vmatpush1.bf16.msra.mxu0 %v177
  %231 = vmatprep.subr.bf16.mxu0 0
  %232 = vmatpush1.bf16.msra.mxu0 %v178
  %233 = vmatprep.subr.bf16.mxu0 0
  %234 = vmatpush1.bf16.msra.mxu0 %v179
  %235 = vmatprep.subr.bf16.mxu0 0
  %236 = vmatpush1.bf16.msra.mxu0 %v180
  %237 = vmatprep.subr.bf16.mxu0 0
  %238 = vmatpush1.bf16.msra.mxu0 %v181
  %239 = vmatprep.subr.bf16.mxu0 0
  %240 = vmatpush1.bf16.msra.mxu0 %v182
  %241 = vmatprep.subr.bf16.mxu0 0
  %242 = vmatpush1.bf16.msra.mxu0 %v183
  %243 = vmatprep.mubr.bf16.mxu0 %v87
  %244 = vmatmul.mubr.bf16.gmra.mrb[0].mxu0 %v86
  %v245 = vpop.f32.mrb[0].mxu0
  %v246 = vadd.f32 %v64, %v245
  %v247 = vpop.f32.mrb[0].mxu0
  %v248 = vpop.f32.mrb[0].mxu0
  %v249 = vadd.f32 %v64, %v248
  %v250 = vpop.f32.mrb[0].mxu0
  %251 = vmatprep.mubr.bf16.mxu0 %v90
  %252 = vmatmul.mubr.bf16.gmra.mrb[0].mxu0 %v89
  %v253 = vpop.f32.mrb[0].mxu0
  %v254 = vadd.f32 %v64, %v253
  %v255 = vpop.f32.mrb[0].mxu0
  %v256 = vpop.f32.mrb[0].mxu0
  %v257 = vadd.f32 %v64, %v256
  %v258 = vpop.f32.mrb[0].mxu0
  %259 = vdwg.mxu0
  %260 = vmatprep.subr.bf16.mxu0 0
  %261 = vmatpush1.bf16.msra.mxu0 %v184
  %262 = vmatprep.subr.bf16.mxu0 0
  %263 = vmatpush1.bf16.msra.mxu0 %v185
  %264 = vmatprep.subr.bf16.mxu0 0
  %265 = vmatpush1.bf16.msra.mxu0 0
  %266 = vmatprep.subr.bf16.mxu0 0
  %267 = vmatpush1.bf16.msra.mxu0 0
  %268 = vmatprep.subr.bf16.mxu0 0
  %269 = vmatpush1.bf16.msra.mxu0 0
  %270 = vmatprep.subr.bf16.mxu0 0
  %271 = vmatpush1.bf16.msra.mxu0 0
  %272 = vmatprep.subr.bf16.mxu0 0
  %273 = vmatpush1.bf16.msra.mxu0 0
  %274 = vmatprep.subr.bf16.mxu0 0
  %275 = vmatpush1.bf16.msra.mxu0 0
  %276 = vmatprep.subr.bf16.mxu0 0
  %277 = vmatpush1.bf16.msra.mxu0 0
  %278 = vmatprep.subr.bf16.mxu0 0
  %279 = vmatpush1.bf16.msra.mxu0 0
  %280 = vmatprep.subr.bf16.mxu0 0
  %281 = vmatpush1.bf16.msra.mxu0 0
  %282 = vmatprep.subr.bf16.mxu0 0
  %283 = vmatpush1.bf16.msra.mxu0 0
  %284 = vmatprep.subr.bf16.mxu0 0
  %285 = vmatpush1.bf16.msra.mxu0 0
  %286 = vmatprep.subr.bf16.mxu0 0
  %287 = vmatpush1.bf16.msra.mxu0 0
  %288 = vmatprep.subr.bf16.mxu0 0
  %289 = vmatpush1.bf16.msra.mxu0 0
  %290 = vmatprep.subr.bf16.mxu0 0
  %291 = vmatpush1.bf16.msra.mxu0 0
  %292 = vmatprep.mubr.bf16.mxu0 0
  %293 = vmatmul.mubr.bf16.gmra.mrb[0].mxu0 %v206
  %v294 = vpop.f32.mrb[0].mxu0
  %v295 = vadd.f32 %v246, %v294
  %v296 = vpop.f32.mrb[0].mxu0
  %v297 = vpop.f32.mrb[0].mxu0
  %v298 = vadd.f32 %v249, %v297
  %v299 = vpop.f32.mrb[0].mxu0
  %300 = vmatprep.mubr.bf16.mxu0 0
  %301 = vmatmul.mubr.bf16.gmra.mrb[0].mxu0 %v209
  %v302 = vpop.f32.mrb[0].mxu0
  %v303 = vadd.f32 %v254, %v302
  %v304 = vpop.f32.mrb[0].mxu0
  %v305 = vpop.f32.mrb[0].mxu0
  %v306 = vadd.f32 %v257, %v305
  %v307 = vpop.f32.mrb[0].mxu0
  %308 = vdwg.mxu0
  %v309 = vmax.f32 %v295, 0.0
  %v310 = vmax.f32 %v298, 0.0
  %v311 = vmax.f32 %v303, 0.0
  %v312 = vmax.f32 %v306, 0.0
  %v313 = vpack.c.bf16 %v310, %v309
  %v314 = vpack.c.bf16 %v312, %v311
  %v317 = vunpack.c.l.b16 %v313
  %v318 = vunpack.c.h.b16 %v313
  %v319 = vunpack.c.l.b16 %v314
  %v320 = vunpack.c.h.b16 %v314
  %v321 = vpack.c.b16 %v317, %v317
  %v322 = vpack.c.b16 %v318, %v318
  %v323 = vpack.c.b16 %v319, %v319
  %v324 = vpack.c.b16 %v320, %v320
  %vm329 = vcmask 257024
  %330 = vst.msk [vmem:[%s3] sm:$0xf] %vm329, %v321
  %331 = vst.msk [vmem:[%s3 + $0x4] sm:$0xf] %vm329, %v322
  %332 = vst.msk [vmem:[%s3 + $0x8] sm:$0xf] %vm329, %v323
  %333 = vst.msk [vmem:[%s3 + $0xc] sm:$0xf] %vm329, %v324
  // Predicated region
  $region14: #{_lambda_.15} parent=0 // pred_check
    _
  $region15: #{_lambda_.15} parent=0 // pred_check_branch
    %335 = sbr.rel (0) target = $region17
  $region16: #{_lambda_.15} parent=0 // pred_region
    _
  $region17: #{_lambda_.15} parent=0 // pred_fallthru
    _
  // Predicated region
  $region18: #{_lambda_.15} parent=0 // pred_check
    _
  $region19: #{_lambda_.15} parent=0 // pred_check_branch
    %337 = sbr.rel (0) target = $region21
  $region20: #{_lambda_.15} parent=0 // pred_region
    _
  $region21: #{_lambda_.15} parent=0 // pred_fallthru
    _

// kernel: _lambda_.19
$region0: #{_lambda_.19}
  #allocation0 [shape = 'u32[]', space=smem, size = 0x4, offset = 0x4, fixed_abs, tag = 'smem constant byte address 0x4 - core index']
  #allocation1 [shape = 'u32[144,128]{1,0:T(1,128)}', space=vmem, size = 0x12000, scoped, tag = 'internal scratch']
  %s0 = inlined_call_operand.vmem [shape: bf16[8,288], index: 0, kind: input, shape index: {}]
  %s1 = inlined_call_operand.vmem [shape: bf16[288,64], index: 1, kind: input, shape index: {}]
  %s2 = inlined_call_operand.vmem [shape: f32[1,64], index: 2, kind: input, shape index: {}]
  %s3 = inlined_call_operand.vmem [shape: bf16[8,64], index: 3, kind: output, shape index: {}]
  %s4 = sld [smem:[#allocation0]]
  $region22: #{_lambda_.19} parent=0
    _
  %s6 = ssub.s32 1, %s4
  %s7 = scalar_select 0, %s6, %s4
  // Predicated region
  $region2: #{_lambda_.19} parent=0 // pred_check
    _
  $region3: #{_lambda_.19} parent=0 // pred_check_branch
    %9 = sbr.rel (0) target = $region5
  $region4: #{_lambda_.19} parent=0 // pred_region
    _
  $region5: #{_lambda_.19} parent=0 // pred_fallthru
    _
  // Predicated region
  $region6: #{_lambda_.19} parent=0 // pred_check
    _
  $region7: #{_lambda_.19} parent=0 // pred_check_branch
    %11 = sbr.rel (0) target = $region9
  $region8: #{_lambda_.19} parent=0 // pred_region
    _
  $region9: #{_lambda_.19} parent=0 // pred_fallthru
    _
  // Predicated region
  $region10: #{_lambda_.19} parent=0 // pred_check
    _
  $region11: #{_lambda_.19} parent=0 // pred_check_branch
    %13 = sbr.rel (0) target = $region13
  $region12: #{_lambda_.19} parent=0 // pred_region
    _
  $region13: #{_lambda_.19} parent=0 // pred_fallthru
    _
  %v15 = vld [vmem:[%s0] sm:$0xff]
  %v16 = vld [vmem:[%s0 + $0x8] sm:$0xf]
  %v17 = vld [vmem:[%s1] sm:$0xf]
  %v18 = vld [vmem:[%s1 + $0x4] sm:$0xf]
  %v19 = vld [vmem:[%s1 + $0x8] sm:$0xf]
  %v20 = vld [vmem:[%s1 + $0xc] sm:$0xf]
  %v21 = vld [vmem:[%s1 + $0x10] sm:$0xf]
  %v22 = vld [vmem:[%s1 + $0x14] sm:$0xf]
  %v23 = vld [vmem:[%s1 + $0x18] sm:$0xf]
  %v24 = vld [vmem:[%s1 + $0x1c] sm:$0xf]
  %v25 = vld [vmem:[%s1 + $0x20] sm:$0xf]
  %v26 = vld [vmem:[%s1 + $0x24] sm:$0xf]
  %v27 = vld [vmem:[%s1 + $0x28] sm:$0xf]
  %v28 = vld [vmem:[%s1 + $0x2c] sm:$0xf]
  %v29 = vld [vmem:[%s1 + $0x30] sm:$0xf]
  %v30 = vld [vmem:[%s1 + $0x34] sm:$0xf]
  %v31 = vld [vmem:[%s1 + $0x38] sm:$0xf]
  %v32 = vld [vmem:[%s1 + $0x3c] sm:$0xf]
  %v33 = vld [vmem:[%s1 + $0x40] sm:$0xf]
  %v34 = vld [vmem:[%s1 + $0x44] sm:$0xf]
  %v35 = vld [vmem:[%s1 + $0x48] sm:$0xf]
  %v36 = vld [vmem:[%s1 + $0x4c] sm:$0xf]
  %v37 = vld [vmem:[%s1 + $0x50] sm:$0xf]
  %v38 = vld [vmem:[%s1 + $0x54] sm:$0xf]
  %v39 = vld [vmem:[%s1 + $0x58] sm:$0xf]
  %v40 = vld [vmem:[%s1 + $0x5c] sm:$0xf]
  %v41 = vld [vmem:[%s1 + $0x60] sm:$0xf]
  %v42 = vld [vmem:[%s1 + $0x64] sm:$0xf]
  %v43 = vld [vmem:[%s1 + $0x68] sm:$0xf]
  %v44 = vld [vmem:[%s1 + $0x6c] sm:$0xf]
  %v45 = vld [vmem:[%s1 + $0x70] sm:$0xf]
  %v46 = vld [vmem:[%s1 + $0x74] sm:$0xf]
  %v47 = vld [vmem:[%s1 + $0x78] sm:$0xf]
  %v48 = vld [vmem:[%s1 + $0x7c] sm:$0xf]
  %v49 = vld [vmem:[%s1 + $0x80] sm:$0xf]
  %v50 = vld [vmem:[%s1 + $0x84] sm:$0xf]
  %v51 = vld [vmem:[%s1 + $0x88] sm:$0xf]
  %v52 = vld [vmem:[%s1 + $0x8c] sm:$0xf]
  %v53 = vld [vmem:[%s2] sm:$0x1]
  %v55 = vlaneseq
  %v56 = vshrl.u32 %v55, 7
  %v57 = vsub.s32 0, %v56
  %v58 = vrot.slane %v53, %v57
  %v62 = vunpack.c.l.b16 %v15
  %v63 = vunpack.c.h.b16 %v15
  %v64 = vunpack.c.l.b16 %v16
  %v65 = vpack.c.b16 %v62, %v62
  %v66 = vpack.c.b16 %v63, %v63
  %v67 = vpack.c.b16 %v64, %v64
  %v106 = vunpack.c.l.b16 %v17
  %v107 = vunpack.c.l.b16 %v18
  %v108 = vunpack.c.l.b16 %v19
  %v109 = vunpack.c.l.b16 %v20
  %v110 = vunpack.c.l.b16 %v21
  %v111 = vunpack.c.l.b16 %v22
  %v112 = vunpack.c.l.b16 %v23
  %v113 = vunpack.c.l.b16 %v24
  %v114 = vunpack.c.l.b16 %v25
  %v115 = vunpack.c.l.b16 %v26
  %v116 = vunpack.c.l.b16 %v27
  %v117 = vunpack.c.l.b16 %v28
  %v118 = vunpack.c.l.b16 %v29
  %v119 = vunpack.c.l.b16 %v30
  %v120 = vunpack.c.l.b16 %v31
  %v121 = vunpack.c.l.b16 %v32
  %v122 = vunpack.c.l.b16 %v33
  %v123 = vunpack.c.l.b16 %v34
  %v124 = vunpack.c.l.b16 %v35
  %v125 = vunpack.c.l.b16 %v36
  %v126 = vunpack.c.l.b16 %v37
  %v127 = vunpack.c.l.b16 %v38
  %v128 = vunpack.c.l.b16 %v39
  %v129 = vunpack.c.l.b16 %v40
  %v130 = vunpack.c.l.b16 %v41
  %v131 = vunpack.c.l.b16 %v42
  %v132 = vunpack.c.l.b16 %v43
  %v133 = vunpack.c.l.b16 %v44
  %v134 = vunpack.c.l.b16 %v45
  %v135 = vunpack.c.l.b16 %v46
  %v136 = vunpack.c.l.b16 %v47
  %v137 = vunpack.c.l.b16 %v48
  %v138 = vunpack.c.l.b16 %v49
  %v139 = vunpack.c.l.b16 %v50
  %v140 = vunpack.c.l.b16 %v51
  %v141 = vunpack.c.l.b16 %v52
  %v142 = vpack.c.b16 %v107, %v106
  %v143 = vpack.c.b16 %v109, %v108
  %v144 = vpack.c.b16 %v111, %v110
  %v145 = vpack.c.b16 %v113, %v112
  %v146 = vpack.c.b16 %v115, %v114
  %v147 = vpack.c.b16 %v117, %v116
  %v148 = vpack.c.b16 %v119, %v118
  %v149 = vpack.c.b16 %v121, %v120
  %v150 = vpack.c.b16 %v123, %v122
  %v151 = vpack.c.b16 %v125, %v124
  %v152 = vpack.c.b16 %v127, %v126
  %v153 = vpack.c.b16 %v129, %v128
  %v154 = vpack.c.b16 %v131, %v130
  %v155 = vpack.c.b16 %v133, %v132
  %v156 = vpack.c.b16 %v135, %v134
  %v157 = vpack.c.b16 %v137, %v136
  %v158 = vpack.c.b16 %v139, %v138
  %v159 = vpack.c.b16 %v141, %v140
  %vm178 = vcmask 261120
  %v180 = vsel %vm178, %v67, 0
  %182 = vmatprep.subr.bf16.mxu0 0
  %183 = vmatpush1.bf16.msra.mxu0 %v142
  %184 = vmatprep.subr.bf16.mxu0 0
  %185 = vmatpush1.bf16.msra.mxu0 %v143
  %186 = vmatprep.subr.bf16.mxu0 0
  %187 = vmatpush1.bf16.msra.mxu0 %v144
  %188 = vmatprep.subr.bf16.mxu0 0
  %189 = vmatpush1.bf16.msra.mxu0 %v145
  %190 = vmatprep.subr.bf16.mxu0 0
  %191 = vmatpush1.bf16.msra.mxu0 %v146
  %192 = vmatprep.subr.bf16.mxu0 0
  %193 = vmatpush1.bf16.msra.mxu0 %v147
  %194 = vmatprep.subr.bf16.mxu0 0
  %195 = vmatpush1.bf16.msra.mxu0 %v148
  %196 = vmatprep.subr.bf16.mxu0 0
  %197 = vmatpush1.bf16.msra.mxu0 %v149
  %198 = vmatprep.subr.bf16.mxu0 0
  %199 = vmatpush1.bf16.msra.mxu0 %v150
  %200 = vmatprep.subr.bf16.mxu0 0
  %201 = vmatpush1.bf16.msra.mxu0 %v151
  %202 = vmatprep.subr.bf16.mxu0 0
  %203 = vmatpush1.bf16.msra.mxu0 %v152
  %204 = vmatprep.subr.bf16.mxu0 0
  %205 = vmatpush1.bf16.msra.mxu0 %v153
  %206 = vmatprep.subr.bf16.mxu0 0
  %207 = vmatpush1.bf16.msra.mxu0 %v154
  %208 = vmatprep.subr.bf16.mxu0 0
  %209 = vmatpush1.bf16.msra.mxu0 %v155
  %210 = vmatprep.subr.bf16.mxu0 0
  %211 = vmatpush1.bf16.msra.mxu0 %v156
  %212 = vmatprep.subr.bf16.mxu0 0
  %213 = vmatpush1.bf16.msra.mxu0 %v157
  %214 = vmatprep.mubr.bf16.mxu0 %v66
  %215 = vmatmul.mubr.bf16.gmra.mrb[0].mxu0 %v65
  %v216 = vpop.f32.mrb[0].mxu0
  %v217 = vadd.f32 %v58, %v216
  %v218 = vpop.f32.mrb[0].mxu0
  %v219 = vpop.f32.mrb[0].mxu0
  %v220 = vpop.f32.mrb[0].mxu0
  %221 = vdwg.mxu0
  %222 = vmatprep.subr.bf16.mxu0 0
  %223 = vmatpush1.bf16.msra.mxu0 %v158
  %224 = vmatprep.subr.bf16.mxu0 0
  %225 = vmatpush1.bf16.msra.mxu0 %v159
  %226 = vmatprep.subr.bf16.mxu0 0
  %227 = vmatpush1.bf16.msra.mxu0 0
  %228 = vmatprep.subr.bf16.mxu0 0
  %229 = vmatpush1.bf16.msra.mxu0 0
  %230 = vmatprep.subr.bf16.mxu0 0
  %231 = vmatpush1.bf16.msra.mxu0 0
  %232 = vmatprep.subr.bf16.mxu0 0
  %233 = vmatpush1.bf16.msra.mxu0 0
  %234 = vmatprep.subr.bf16.mxu0 0
  %235 = vmatpush1.bf16.msra.mxu0 0
  %236 = vmatprep.subr.bf16.mxu0 0
  %237 = vmatpush1.bf16.msra.mxu0 0
  %238 = vmatprep.subr.bf16.mxu0 0
  %239 = vmatpush1.bf16.msra.mxu0 0
  %240 = vmatprep.subr.bf16.mxu0 0
  %241 = vmatpush1.bf16.msra.mxu0 0
  %242 = vmatprep.subr.bf16.mxu0 0
  %243 = vmatpush1.bf16.msra.mxu0 0
  %244 = vmatprep.subr.bf16.mxu0 0
  %245 = vmatpush1.bf16.msra.mxu0 0
  %246 = vmatprep.subr.bf16.mxu0 0
  %247 = vmatpush1.bf16.msra.mxu0 0
  %248 = vmatprep.subr.bf16.mxu0 0
  %249 = vmatpush1.bf16.msra.mxu0 0
  %250 = vmatprep.subr.bf16.mxu0 0
  %251 = vmatpush1.bf16.msra.mxu0 0
  %252 = vmatprep.subr.bf16.mxu0 0
  %253 = vmatpush1.bf16.msra.mxu0 0
  %254 = vmatprep.mubr.bf16.mxu0 0
  %255 = vmatmul.mubr.bf16.gmra.mrb[0].mxu0 %v180
  %v256 = vpop.f32.mrb[0].mxu0
  %v257 = vadd.f32 %v217, %v256
  %v258 = vpop.f32.mrb[0].mxu0
  %v259 = vpop.f32.mrb[0].mxu0
  %v260 = vpop.f32.mrb[0].mxu0
  %261 = vdwg.mxu0
  %v262 = vmax.f32 %v257, 0.0
  %v263 = vpack.c.bf16 %v262, %v262
  %vm264 = vcmask 519168
  %265 = vst.msk [vmem:[%s3] sm:$0xf] %vm264, %v263
  // Predicated region
  $region14: #{_lambda_.19} parent=0 // pred_check
    _
  $region15: #{_lambda_.19} parent=0 // pred_check_branch
    %267 = sbr.rel (0) target = $region17
  $region16: #{_lambda_.19} parent=0 // pred_region
    _
  $region17: #{_lambda_.19} parent=0 // pred_fallthru
    _
  // Predicated region
  $region18: #{_lambda_.19} parent=0 // pred_check
    _
  $region19: #{_lambda_.19} parent=0 // pred_check_branch
    %269 = sbr.rel (0) target = $region21
  $region20: #{_lambda_.19} parent=0 // pred_region
    _
  $region21: #{_lambda_.19} parent=0 // pred_fallthru
    _

// kernel: _lambda_.20
$region0: #{_lambda_.20}
  #allocation0 [shape = 'u32[]', space=smem, size = 0x4, offset = 0x4, fixed_abs, tag = 'smem constant byte address 0x4 - core index']
  #allocation1 [shape = 'u32[144,128]{1,0:T(1,128)}', space=vmem, size = 0x12000, scoped, tag = 'internal scratch']
  %s0 = inlined_call_operand.vmem [shape: bf16[8,576], index: 0, kind: input, shape index: {}]
  %s1 = inlined_call_operand.vmem [shape: bf16[576,64], index: 1, kind: input, shape index: {}]
  %s2 = inlined_call_operand.vmem [shape: f32[1,64], index: 2, kind: input, shape index: {}]
  %s3 = inlined_call_operand.vmem [shape: bf16[8,64], index: 3, kind: output, shape index: {}]
  %s4 = sld [smem:[#allocation0]]
  $region22: #{_lambda_.20} parent=0
    _
  %s6 = ssub.s32 1, %s4
  %s7 = scalar_select 0, %s6, %s4
  // Predicated region
  $region2: #{_lambda_.20} parent=0 // pred_check
    _
  $region3: #{_lambda_.20} parent=0 // pred_check_branch
    %9 = sbr.rel (0) target = $region5
  $region4: #{_lambda_.20} parent=0 // pred_region
    _
  $region5: #{_lambda_.20} parent=0 // pred_fallthru
    _
  // Predicated region
  $region6: #{_lambda_.20} parent=0 // pred_check
    _
  $region7: #{_lambda_.20} parent=0 // pred_check_branch
    %11 = sbr.rel (0) target = $region9
  $region8: #{_lambda_.20} parent=0 // pred_region
    _
  $region9: #{_lambda_.20} parent=0 // pred_fallthru
    _
  // Predicated region
  $region10: #{_lambda_.20} parent=0 // pred_check
    _
  $region11: #{_lambda_.20} parent=0 // pred_check_branch
    %13 = sbr.rel (0) target = $region13
  $region12: #{_lambda_.20} parent=0 // pred_region
    _
  $region13: #{_lambda_.20} parent=0 // pred_fallthru
    _
  %v15 = vld [vmem:[%s0] sm:$0xff]
  %v16 = vld [vmem:[%s0 + $0x8] sm:$0xff]
  %v17 = vld [vmem:[%s0 + $0x10] sm:$0xf]
  %v18 = vld [vmem:[%s1] sm:$0xf]
  %v19 = vld [vmem:[%s1 + $0x4] sm:$0xf]
  %v20 = vld [vmem:[%s1 + $0x8] sm:$0xf]
  %v21 = vld [vmem:[%s1 + $0xc] sm:$0xf]
  %v22 = vld [vmem:[%s1 + $0x10] sm:$0xf]
  %v23 = vld [vmem:[%s1 + $0x14] sm:$0xf]
  %v24 = vld [vmem:[%s1 + $0x18] sm:$0xf]
  %v25 = vld [vmem:[%s1 + $0x1c] sm:$0xf]
  %v26 = vld [vmem:[%s1 + $0x20] sm:$0xf]
  %v27 = vld [vmem:[%s1 + $0x24] sm:$0xf]
  %v28 = vld [vmem:[%s1 + $0x28] sm:$0xf]
  %v29 = vld [vmem:[%s1 + $0x2c] sm:$0xf]
  %v30 = vld [vmem:[%s1 + $0x30] sm:$0xf]
  %v31 = vld [vmem:[%s1 + $0x34] sm:$0xf]
  %v32 = vld [vmem:[%s1 + $0x38] sm:$0xf]
  %v33 = vld [vmem:[%s1 + $0x3c] sm:$0xf]
  %v34 = vld [vmem:[%s1 + $0x40] sm:$0xf]
  %v35 = vld [vmem:[%s1 + $0x44] sm:$0xf]
  %v36 = vld [vmem:[%s1 + $0x48] sm:$0xf]
  %v37 = vld [vmem:[%s1 + $0x4c] sm:$0xf]
  %v38 = vld [vmem:[%s1 + $0x50] sm:$0xf]
  %v39 = vld [vmem:[%s1 + $0x54] sm:$0xf]
  %v40 = vld [vmem:[%s1 + $0x58] sm:$0xf]
  %v41 = vld [vmem:[%s1 + $0x5c] sm:$0xf]
  %v42 = vld [vmem:[%s1 + $0x60] sm:$0xf]
  %v43 = vld [vmem:[%s1 + $0x64] sm:$0xf]
  %v44 = vld [vmem:[%s1 + $0x68] sm:$0xf]
  %v45 = vld [vmem:[%s1 + $0x6c] sm:$0xf]
  %v46 = vld [vmem:[%s1 + $0x70] sm:$0xf]
  %v47 = vld [vmem:[%s1 + $0x74] sm:$0xf]
  %v48 = vld [vmem:[%s1 + $0x78] sm:$0xf]
  %v49 = vld [vmem:[%s1 + $0x7c] sm:$0xf]
  %v50 = vld [vmem:[%s1 + $0x80] sm:$0xf]
  %v51 = vld [vmem:[%s1 + $0x84] sm:$0xf]
  %v52 = vld [vmem:[%s1 + $0x88] sm:$0xf]
  %v53 = vld [vmem:[%s1 + $0x8c] sm:$0xf]
  %v54 = vld [vmem:[%s1 + $0x90] sm:$0xf]
  %v55 = vld [vmem:[%s1 + $0x94] sm:$0xf]
  %v56 = vld [vmem:[%s1 + $0x98] sm:$0xf]
  %v57 = vld [vmem:[%s1 + $0x9c] sm:$0xf]
  %v58 = vld [vmem:[%s1 + $0xa0] sm:$0xf]
  %v59 = vld [vmem:[%s1 + $0xa4] sm:$0xf]
  %v60 = vld [vmem:[%s1 + $0xa8] sm:$0xf]
  %v61 = vld [vmem:[%s1 + $0xac] sm:$0xf]
  %v62 = vld [vmem:[%s1 + $0xb0] sm:$0xf]
  %v63 = vld [vmem:[%s1 + $0xb4] sm:$0xf]
  %v64 = vld [vmem:[%s1 + $0xb8] sm:$0xf]
  %v65 = vld [vmem:[%s1 + $0xbc] sm:$0xf]
  %v66 = vld [vmem:[%s1 + $0xc0] sm:$0xf]
  %v67 = vld [vmem:[%s1 + $0xc4] sm:$0xf]
  %v68 = vld [vmem:[%s1 + $0xc8] sm:$0xf]
  %v69 = vld [vmem:[%s1 + $0xcc] sm:$0xf]
  %v70 = vld [vmem:[%s1 + $0xd0] sm:$0xf]
  %v71 = vld [vmem:[%s1 + $0xd4] sm:$0xf]
  %v72 = vld [vmem:[%s1 + $0xd8] sm:$0xf]
  %v73 = vld [vmem:[%s1 + $0xdc] sm:$0xf]
  %v74 = vld [vmem:[%s1 + $0xe0] sm:$0xf]
  %v75 = vld [vmem:[%s1 + $0xe4] sm:$0xf]
  %v76 = vld [vmem:[%s1 + $0xe8] sm:$0xf]
  %v77 = vld [vmem:[%s1 + $0xec] sm:$0xf]
  %v78 = vld [vmem:[%s1 + $0xf0] sm:$0xf]
  %v79 = vld [vmem:[%s1 + $0xf4] sm:$0xf]
  %v80 = vld [vmem:[%s1 + $0xf8] sm:$0xf]
  %v81 = vld [vmem:[%s1 + $0xfc] sm:$0xf]
  %v82 = vld [vmem:[%s1 + $0x100] sm:$0xf]
  %v83 = vld [vmem:[%s1 + $0x104] sm:$0xf]
  %v84 = vld [vmem:[%s1 + $0x108] sm:$0xf]
  %v85 = vld [vmem:[%s1 + $0x10c] sm:$0xf]
  %v86 = vld [vmem:[%s1 + $0x110] sm:$0xf]
  %v87 = vld [vmem:[%s1 + $0x114] sm:$0xf]
  %v88 = vld [vmem:[%s1 + $0x118] sm:$0xf]
  %v89 = vld [vmem:[%s1 + $0x11c] sm:$0xf]
  %v90 = vld [vmem:[%s2] sm:$0x1]
  %v92 = vlaneseq
  %v93 = vshrl.u32 %v92, 7
  %v94 = vsub.s32 0, %v93
  %v95 = vrot.slane %v90, %v94
  %v100 = vunpack.c.l.b16 %v15
  %v101 = vunpack.c.h.b16 %v15
  %v102 = vunpack.c.l.b16 %v16
  %v103 = vunpack.c.h.b16 %v16
  %v104 = vunpack.c.l.b16 %v17
  %v105 = vpack.c.b16 %v100, %v100
  %v106 = vpack.c.b16 %v101, %v101
  %v107 = vpack.c.b16 %v102, %v102
  %v108 = vpack.c.b16 %v103, %v103
  %v109 = vpack.c.b16 %v104, %v104
  %v186 = vunpack.c.l.b16 %v18
  %v187 = vunpack.c.l.b16 %v19
  %v188 = vunpack.c.l.b16 %v20
  %v189 = vunpack.c.l.b16 %v21
  %v190 = vunpack.c.l.b16 %v22
  %v191 = vunpack.c.l.b16 %v23
  %v192 = vunpack.c.l.b16 %v24
  %v193 = vunpack.c.l.b16 %v25
  %v194 = vunpack.c.l.b16 %v26
  %v195 = vunpack.c.l.b16 %v27
  %v196 = vunpack.c.l.b16 %v28
  %v197 = vunpack.c.l.b16 %v29
  %v198 = vunpack.c.l.b16 %v30
  %v199 = vunpack.c.l.b16 %v31
  %v200 = vunpack.c.l.b16 %v32
  %v201 = vunpack.c.l.b16 %v33
  %v202 = vunpack.c.l.b16 %v34
  %v203 = vunpack.c.l.b16 %v35
  %v204 = vunpack.c.l.b16 %v36
  %v205 = vunpack.c.l.b16 %v37
  %v206 = vunpack.c.l.b16 %v38
  %v207 = vunpack.c.l.b16 %v39
  %v208 = vunpack.c.l.b16 %v40
  %v209 = vunpack.c.l.b16 %v41
  %v210 = vunpack.c.l.b16 %v42
  %v211 = vunpack.c.l.b16 %v43
  %v212 = vunpack.c.l.b16 %v44
  %v213 = vunpack.c.l.b16 %v45
  %v214 = vunpack.c.l.b16 %v46
  %v215 = vunpack.c.l.b16 %v47
  %v216 = vunpack.c.l.b16 %v48
  %v217 = vunpack.c.l.b16 %v49
  %v218 = vunpack.c.l.b16 %v50
  %v219 = vunpack.c.l.b16 %v51
  %v220 = vunpack.c.l.b16 %v52
  %v221 = vunpack.c.l.b16 %v53
  %v222 = vunpack.c.l.b16 %v54
  %v223 = vunpack.c.l.b16 %v55
  %v224 = vunpack.c.l.b16 %v56
  %v225 = vunpack.c.l.b16 %v57
  %v226 = vunpack.c.l.b16 %v58
  %v227 = vunpack.c.l.b16 %v59
  %v228 = vunpack.c.l.b16 %v60
  %v229 = vunpack.c.l.b16 %v61
  %v230 = vunpack.c.l.b16 %v62
  %v231 = vunpack.c.l.b16 %v63
  %v232 = vunpack.c.l.b16 %v64
  %v233 = vunpack.c.l.b16 %v65
  %v234 = vunpack.c.l.b16 %v66
  %v235 = vunpack.c.l.b16 %v67
  %v236 = vunpack.c.l.b16 %v68
  %v237 = vunpack.c.l.b16 %v69
  %v238 = vunpack.c.l.b16 %v70
  %v239 = vunpack.c.l.b16 %v71
  %v240 = vunpack.c.l.b16 %v72
  %v241 = vunpack.c.l.b16 %v73
  %v242 = vunpack.c.l.b16 %v74
  %v243 = vunpack.c.l.b16 %v75
  %v244 = vunpack.c.l.b16 %v76
  %v245 = vunpack.c.l.b16 %v77
  %v246 = vunpack.c.l.b16 %v78
  %v247 = vunpack.c.l.b16 %v79
  %v248 = vunpack.c.l.b16 %v80
  %v249 = vunpack.c.l.b16 %v81
  %v250 = vunpack.c.l.b16 %v82
  %v251 = vunpack.c.l.b16 %v83
  %v252 = vunpack.c.l.b16 %v84
  %v253 = vunpack.c.l.b16 %v85
  %v254 = vunpack.c.l.b16 %v86
  %v255 = vunpack.c.l.b16 %v87
  %v256 = vunpack.c.l.b16 %v88
  %v257 = vunpack.c.l.b16 %v89
  %v258 = vpack.c.b16 %v187, %v186
  %v259 = vpack.c.b16 %v189, %v188
  %v260 = vpack.c.b16 %v191, %v190
  %v261 = vpack.c.b16 %v193, %v192
  %v262 = vpack.c.b16 %v195, %v194
  %v263 = vpack.c.b16 %v197, %v196
  %v264 = vpack.c.b16 %v199, %v198
  %v265 = vpack.c.b16 %v201, %v200
  %v266 = vpack.c.b16 %v203, %v202
  %v267 = vpack.c.b16 %v205, %v204
  %v268 = vpack.c.b16 %v207, %v206
  %v269 = vpack.c.b16 %v209, %v208
  %v270 = vpack.c.b16 %v211, %v210
  %v271 = vpack.c.b16 %v213, %v212
  %v272 = vpack.c.b16 %v215, %v214
  %v273 = vpack.c.b16 %v217, %v216
  %v274 = vpack.c.b16 %v219, %v218
  %v275 = vpack.c.b16 %v221, %v220
  %v276 = vpack.c.b16 %v223, %v222
  %v277 = vpack.c.b16 %v225, %v224
  %v278 = vpack.c.b16 %v227, %v226
  %v279 = vpack.c.b16 %v229, %v228
  %v280 = vpack.c.b16 %v231, %v230
  %v281 = vpack.c.b16 %v233, %v232
  %v282 = vpack.c.b16 %v235, %v234
  %v283 = vpack.c.b16 %v237, %v236
  %v284 = vpack.c.b16 %v239, %v238
  %v285 = vpack.c.b16 %v241, %v240
  %v286 = vpack.c.b16 %v243, %v242
  %v287 = vpack.c.b16 %v245, %v244
  %v288 = vpack.c.b16 %v247, %v246
  %v289 = vpack.c.b16 %v249, %v248
  %v290 = vpack.c.b16 %v251, %v250
  %v291 = vpack.c.b16 %v253, %v252
  %v292 = vpack.c.b16 %v255, %v254
  %v293 = vpack.c.b16 %v257, %v256
  %vm330 = vcmask 523264
  %v332 = vsel %vm330, %v109, 0
  %334 = vmatprep.subr.bf16.mxu0 0
  %335 = vmatpush1.bf16.msra.mxu0 %v258
  %336 = vmatprep.subr.bf16.mxu0 0
  %337 = vmatpush1.bf16.msra.mxu0 %v259
  %338 = vmatprep.subr.bf16.mxu0 0
  %339 = vmatpush1.bf16.msra.mxu0 %v260
  %340 = vmatprep.subr.bf16.mxu0 0
  %341 = vmatpush1.bf16.msra.mxu0 %v261
  %342 = vmatprep.subr.bf16.mxu0 0
  %343 = vmatpush1.bf16.msra.mxu0 %v262
  %344 = vmatprep.subr.bf16.mxu0 0
  %345 = vmatpush1.bf16.msra.mxu0 %v263
  %346 = vmatprep.subr.bf16.mxu0 0
  %347 = vmatpush1.bf16.msra.mxu0 %v264
  %348 = vmatprep.subr.bf16.mxu0 0
  %349 = vmatpush1.bf16.msra.mxu0 %v265
  %350 = vmatprep.subr.bf16.mxu0 0
  %351 = vmatpush1.bf16.msra.mxu0 %v266
  %352 = vmatprep.subr.bf16.mxu0 0
  %353 = vmatpush1.bf16.msra.mxu0 %v267
  %354 = vmatprep.subr.bf16.mxu0 0
  %355 = vmatpush1.bf16.msra.mxu0 %v268
  %356 = vmatprep.subr.bf16.mxu0 0
  %357 = vmatpush1.bf16.msra.mxu0 %v269
  %358 = vmatprep.subr.bf16.mxu0 0
  %359 = vmatpush1.bf16.msra.mxu0 %v270
  %360 = vmatprep.subr.bf16.mxu0 0
  %361 = vmatpush1.bf16.msra.mxu0 %v271
  %362 = vmatprep.subr.bf16.mxu0 0
  %363 = vmatpush1.bf16.msra.mxu0 %v272
  %364 = vmatprep.subr.bf16.mxu0 0
  %365 = vmatpush1.bf16.msra.mxu0 %v273
  %366 = vmatprep.mubr.bf16.mxu0 %v106
  %367 = vmatmul.mubr.bf16.gmra.mrb[0].mxu0 %v105
  %v368 = vpop.f32.mrb[0].mxu0
  %v369 = vadd.f32 %v95, %v368
  %v370 = vpop.f32.mrb[0].mxu0
  %v371 = vpop.f32.mrb[0].mxu0
  %v372 = vpop.f32.mrb[0].mxu0
  %373 = vdwg.mxu0
  %374 = vmatprep.subr.bf16.mxu0 0
  %375 = vmatpush1.bf16.msra.mxu0 %v274
  %376 = vmatprep.subr.bf16.mxu0 0
  %377 = vmatpush1.bf16.msra.mxu0 %v275
  %378 = vmatprep.subr.bf16.mxu0 0
  %379 = vmatpush1.bf16.msra.mxu0 %v276
  %380 = vmatprep.subr.bf16.mxu0 0
  %381 = vmatpush1.bf16.msra.mxu0 %v277
  %382 = vmatprep.subr.bf16.mxu0 0
  %383 = vmatpush1.bf16.msra.mxu0 %v278
  %384 = vmatprep.subr.bf16.mxu0 0
  %385 = vmatpush1.bf16.msra.mxu0 %v279
  %386 = vmatprep.subr.bf16.mxu0 0
  %387 = vmatpush1.bf16.msra.mxu0 %v280
  %388 = vmatprep.subr.bf16.mxu0 0
  %389 = vmatpush1.bf16.msra.mxu0 %v281
  %390 = vmatprep.subr.bf16.mxu0 0
  %391 = vmatpush1.bf16.msra.mxu0 %v282
  %392 = vmatprep.subr.bf16.mxu0 0
  %393 = vmatpush1.bf16.msra.mxu0 %v283
  %394 = vmatprep.subr.bf16.mxu0 0
  %395 = vmatpush1.bf16.msra.mxu0 %v284
  %396 = vmatprep.subr.bf16.mxu0 0
  %397 = vmatpush1.bf16.msra.mxu0 %v285
  %398 = vmatprep.subr.bf16.mxu0 0
  %399 = vmatpush1.bf16.msra.mxu0 %v286
  %400 = vmatprep.subr.bf16.mxu0 0
  %401 = vmatpush1.bf16.msra.mxu0 %v287
  %402 = vmatprep.subr.bf16.mxu0 0
  %403 = vmatpush1.bf16.msra.mxu0 %v288
  %404 = vmatprep.subr.bf16.mxu0 0
  %405 = vmatpush1.bf16.msra.mxu0 %v289
  %406 = vmatprep.mubr.bf16.mxu0 %v108
  %407 = vmatmul.mubr.bf16.gmra.mrb[0].mxu0 %v107
  %v408 = vpop.f32.mrb[0].mxu0
  %v409 = vadd.f32 %v369, %v408
  %v410 = vpop.f32.mrb[0].mxu0
  %v411 = vpop.f32.mrb[0].mxu0
  %v412 = vpop.f32.mrb[0].mxu0
  %413 = vdwg.mxu0
  %414 = vmatprep.subr.bf16.mxu0 0
  %415 = vmatpush1.bf16.msra.mxu0 %v290
  %416 = vmatprep.subr.bf16.mxu0 0
  %417 = vmatpush1.bf16.msra.mxu0 %v291
  %418 = vmatprep.subr.bf16.mxu0 0
  %419 = vmatpush1.bf16.msra.mxu0 %v292
  %420 = vmatprep.subr.bf16.mxu0 0
  %421 = vmatpush1.bf16.msra.mxu0 %v293
  %422 = vmatprep.subr.bf16.mxu0 0
  %423 = vmatpush1.bf16.msra.mxu0 0
  %424 = vmatprep.subr.bf16.mxu0 0
  %425 = vmatpush1.bf16.msra.mxu0 0
  %426 = vmatprep.subr.bf16.mxu0 0
  %427 = vmatpush1.bf16.msra.mxu0 0
  %428 = vmatprep.subr.bf16.mxu0 0
  %429 = vmatpush1.bf16.msra.mxu0 0
  %430 = vmatprep.subr.bf16.mxu0 0
  %431 = vmatpush1.bf16.msra.mxu0 0
  %432 = vmatprep.subr.bf16.mxu0 0
  %433 = vmatpush1.bf16.msra.mxu0 0
  %434 = vmatprep.subr.bf16.mxu0 0
  %435 = vmatpush1.bf16.msra.mxu0 0
  %436 = vmatprep.subr.bf16.mxu0 0
  %437 = vmatpush1.bf16.msra.mxu0 0
  %438 = vmatprep.subr.bf16.mxu0 0
  %439 = vmatpush1.bf16.msra.mxu0 0
  %440 = vmatprep.subr.bf16.mxu0 0
  %441 = vmatpush1.bf16.msra.mxu0 0
  %442 = vmatprep.subr.bf16.mxu0 0
  %443 = vmatpush1.bf16.msra.mxu0 0
  %444 = vmatprep.subr.bf16.mxu0 0
  %445 = vmatpush1.bf16.msra.mxu0 0
  %446 = vmatprep.mubr.bf16.mxu0 0
  %447 = vmatmul.mubr.bf16.gmra.mrb[0].mxu0 %v332
  %v448 = vpop.f32.mrb[0].mxu0
  %v449 = vadd.f32 %v409, %v448
  %v450 = vpop.f32.mrb[0].mxu0
  %v451 = vpop.f32.mrb[0].mxu0
  %v452 = vpop.f32.mrb[0].mxu0
  %453 = vdwg.mxu0
  %v454 = vmax.f32 %v449, 0.0
  %v455 = vpack.c.bf16 %v454, %v454
  %vm456 = vcmask 519168
  %457 = vst.msk [vmem:[%s3] sm:$0xf] %vm456, %v455
  // Predicated region
  $region14: #{_lambda_.20} parent=0 // pred_check
    _
  $region15: #{_lambda_.20} parent=0 // pred_check_branch
    %459 = sbr.rel (0) target = $region17
  $region16: #{_lambda_.20} parent=0 // pred_region
    _
  $region17: #{_lambda_.20} parent=0 // pred_fallthru
    _
  // Predicated region
  $region18: #{_lambda_.20} parent=0 // pred_check
    _
  $region19: #{_lambda_.20} parent=0 // pred_check_branch
    %461 = sbr.rel (0) target = $region21
  $region20: #{_lambda_.20} parent=0 // pred_region
    _
  $region21: #{_lambda_.20} parent=0 // pred_fallthru
    _

// kernel: _lambda_.22
$region0: #{_lambda_.22}
  #allocation0 [shape = 'u32[]', space=smem, size = 0x4, offset = 0x4, fixed_abs, tag = 'smem constant byte address 0x4 - core index']
  #allocation1 [shape = 'u32[144,128]{1,0:T(1,128)}', space=vmem, size = 0x12000, scoped, tag = 'internal scratch']
  %s0 = inlined_call_operand.vmem [shape: bf16[8,64], index: 0, kind: input, shape index: {}]
  %s1 = inlined_call_operand.vmem [shape: bf16[64,1024], index: 1, kind: input, shape index: {}]
  %s2 = inlined_call_operand.vmem [shape: f32[1,1024], index: 2, kind: input, shape index: {}]
  %s3 = inlined_call_operand.vmem [shape: bf16[8,1024], index: 3, kind: output, shape index: {}]
  %s4 = sld [smem:[#allocation0]]
  $region22: #{_lambda_.22} parent=0
    _
  %s6 = ssub.s32 1, %s4
  %s7 = scalar_select 0, %s6, %s4
  // Predicated region
  $region2: #{_lambda_.22} parent=0 // pred_check
    _
  $region3: #{_lambda_.22} parent=0 // pred_check_branch
    %9 = sbr.rel (0) target = $region5
  $region4: #{_lambda_.22} parent=0 // pred_region
    _
  $region5: #{_lambda_.22} parent=0 // pred_fallthru
    _
  // Predicated region
  $region6: #{_lambda_.22} parent=0 // pred_check
    _
  $region7: #{_lambda_.22} parent=0 // pred_check_branch
    %11 = sbr.rel (0) target = $region9
  $region8: #{_lambda_.22} parent=0 // pred_region
    _
  $region9: #{_lambda_.22} parent=0 // pred_fallthru
    _
  // Predicated region
  $region10: #{_lambda_.22} parent=0 // pred_check
    _
  $region11: #{_lambda_.22} parent=0 // pred_check_branch
    %13 = sbr.rel (0) target = $region13
  $region12: #{_lambda_.22} parent=0 // pred_region
    _
  $region13: #{_lambda_.22} parent=0 // pred_fallthru
    _
  %v15 = vld [vmem:[%s0] sm:$0xf]
  %v16 = vld [vmem:[%s1] sm:$0xff]
  %v17 = vld [vmem:[%s1 + $0x8] sm:$0xff]
  %v18 = vld [vmem:[%s1 + $0x10] sm:$0xff]
  %v19 = vld [vmem:[%s1 + $0x18] sm:$0xff]
  %v20 = vld [vmem:[%s1 + $0x20] sm:$0xff]
  %v21 = vld [vmem:[%s1 + $0x28] sm:$0xff]
  %v22 = vld [vmem:[%s1 + $0x30] sm:$0xff]
  %v23 = vld [vmem:[%s1 + $0x38] sm:$0xff]
  %v24 = vld [vmem:[%s1 + $0x40] sm:$0xff]
  %v25 = vld [vmem:[%s1 + $0x48] sm:$0xff]
  %v26 = vld [vmem:[%s1 + $0x50] sm:$0xff]
  %v27 = vld [vmem:[%s1 + $0x58] sm:$0xff]
  %v28 = vld [vmem:[%s1 + $0x60] sm:$0xff]
  %v29 = vld [vmem:[%s1 + $0x68] sm:$0xff]
  %v30 = vld [vmem:[%s1 + $0x70] sm:$0xff]
  %v31 = vld [vmem:[%s1 + $0x78] sm:$0xff]
  %v32 = vld [vmem:[%s1 + $0x80] sm:$0xff]
  %v33 = vld [vmem:[%s1 + $0x88] sm:$0xff]
  %v34 = vld [vmem:[%s1 + $0x90] sm:$0xff]
  %v35 = vld [vmem:[%s1 + $0x98] sm:$0xff]
  %v36 = vld [vmem:[%s1 + $0xa0] sm:$0xff]
  %v37 = vld [vmem:[%s1 + $0xa8] sm:$0xff]
  %v38 = vld [vmem:[%s1 + $0xb0] sm:$0xff]
  %v39 = vld [vmem:[%s1 + $0xb8] sm:$0xff]
  %v40 = vld [vmem:[%s1 + $0xc0] sm:$0xff]
  %v41 = vld [vmem:[%s1 + $0xc8] sm:$0xff]
  %v42 = vld [vmem:[%s1 + $0xd0] sm:$0xff]
  %v43 = vld [vmem:[%s1 + $0xd8] sm:$0xff]
  %v44 = vld [vmem:[%s1 + $0xe0] sm:$0xff]
  %v45 = vld [vmem:[%s1 + $0xe8] sm:$0xff]
  %v46 = vld [vmem:[%s1 + $0xf0] sm:$0xff]
  %v47 = vld [vmem:[%s1 + $0xf8] sm:$0xff]
  %v48 = vld [vmem:[%s2] sm:$0xff]
  %v50 = vlaneseq
  %v51 = vshrl.u32 %v50, 7
  %v52 = vsub.s32 0, %v51
  %v53 = vrot.slane %v48, %v52
  %v54 = vlaneseq
  %v55 = vshrl.u32 %v54, 7
  %v56 = vsub.s32 1, %v55
  %v57 = vrot.slane %v48, %v56
  %v58 = vlaneseq
  %v59 = vshrl.u32 %v58, 7
  %v60 = vsub.s32 2, %v59
  %v61 = vrot.slane %v48, %v60
  %v62 = vlaneseq
  %v63 = vshrl.u32 %v62, 7
  %v64 = vsub.s32 3, %v63
  %v65 = vrot.slane %v48, %v64
  %v66 = vlaneseq
  %v67 = vshrl.u32 %v66, 7
  %v68 = vsub.s32 4, %v67
  %v69 = vrot.slane %v48, %v68
  %v70 = vlaneseq
  %v71 = vshrl.u32 %v70, 7
  %v72 = vsub.s32 5, %v71
  %v73 = vrot.slane %v48, %v72
  %v74 = vlaneseq
  %v75 = vshrl.u32 %v74, 7
  %v76 = vsub.s32 6, %v75
  %v77 = vrot.slane %v48, %v76
  %v78 = vlaneseq
  %v79 = vshrl.u32 %v78, 7
  %v80 = vsub.s32 7, %v79
  %v81 = vrot.slane %v48, %v80
  %v122 = vunpack.c.l.b16 %v16
  %v123 = vunpack.c.h.b16 %v16
  %v124 = vunpack.c.l.b16 %v17
  %v125 = vunpack.c.h.b16 %v17
  %v126 = vunpack.c.l.b16 %v18
  %v127 = vunpack.c.h.b16 %v18
  %v128 = vunpack.c.l.b16 %v19
  %v129 = vunpack.c.h.b16 %v19
  %v130 = vunpack.c.l.b16 %v20
  %v131 = vunpack.c.h.b16 %v20
  %v132 = vunpack.c.l.b16 %v21
  %v133 = vunpack.c.h.b16 %v21
  %v134 = vunpack.c.l.b16 %v22
  %v135 = vunpack.c.h.b16 %v22
  %v136 = vunpack.c.l.b16 %v23
  %v137 = vunpack.c.h.b16 %v23
  %v138 = vunpack.c.l.b16 %v24
  %v139 = vunpack.c.h.b16 %v24
  %v140 = vunpack.c.l.b16 %v25
  %v141 = vunpack.c.h.b16 %v25
  %v142 = vunpack.c.l.b16 %v26
  %v143 = vunpack.c.h.b16 %v26
  %v144 = vunpack.c.l.b16 %v27
  %v145 = vunpack.c.h.b16 %v27
  %v146 = vunpack.c.l.b16 %v28
  %v147 = vunpack.c.h.b16 %v28
  %v148 = vunpack.c.l.b16 %v29
  %v149 = vunpack.c.h.b16 %v29
  %v150 = vunpack.c.l.b16 %v30
  %v151 = vunpack.c.h.b16 %v30
  %v152 = vunpack.c.l.b16 %v31
  %v153 = vunpack.c.h.b16 %v31
  %v154 = vunpack.c.l.b16 %v32
  %v155 = vunpack.c.h.b16 %v32
  %v156 = vunpack.c.l.b16 %v33
  %v157 = vunpack.c.h.b16 %v33
  %v158 = vunpack.c.l.b16 %v34
  %v159 = vunpack.c.h.b16 %v34
  %v160 = vunpack.c.l.b16 %v35
  %v161 = vunpack.c.h.b16 %v35
  %v162 = vunpack.c.l.b16 %v36
  %v163 = vunpack.c.h.b16 %v36
  %v164 = vunpack.c.l.b16 %v37
  %v165 = vunpack.c.h.b16 %v37
  %v166 = vunpack.c.l.b16 %v38
  %v167 = vunpack.c.h.b16 %v38
  %v168 = vunpack.c.l.b16 %v39
  %v169 = vunpack.c.h.b16 %v39
  %v170 = vunpack.c.l.b16 %v40
  %v171 = vunpack.c.h.b16 %v40
  %v172 = vunpack.c.l.b16 %v41
  %v173 = vunpack.c.h.b16 %v41
  %v174 = vunpack.c.l.b16 %v42
  %v175 = vunpack.c.h.b16 %v42
  %v176 = vunpack.c.l.b16 %v43
  %v177 = vunpack.c.h.b16 %v43
  %v178 = vunpack.c.l.b16 %v44
  %v179 = vunpack.c.h.b16 %v44
  %v180 = vunpack.c.l.b16 %v45
  %v181 = vunpack.c.h.b16 %v45
  %v182 = vunpack.c.l.b16 %v46
  %v183 = vunpack.c.h.b16 %v46
  %v184 = vunpack.c.l.b16 %v47
  %v185 = vunpack.c.h.b16 %v47
  %v186 = vpack.c.b16 %v130, %v122
  %v187 = vpack.c.b16 %v131, %v123
  %v188 = vpack.c.b16 %v132, %v124
  %v189 = vpack.c.b16 %v133, %v125
  %v190 = vpack.c.b16 %v134, %v126
  %v191 = vpack.c.b16 %v135, %v127
  %v192 = vpack.c.b16 %v136, %v128
  %v193 = vpack.c.b16 %v137, %v129
  %v194 = vpack.c.b16 %v146, %v138
  %v195 = vpack.c.b16 %v147, %v139
  %v196 = vpack.c.b16 %v148, %v140
  %v197 = vpack.c.b16 %v149, %v141
  %v198 = vpack.c.b16 %v150, %v142
  %v199 = vpack.c.b16 %v151, %v143
  %v200 = vpack.c.b16 %v152, %v144
  %v201 = vpack.c.b16 %v153, %v145
  %v202 = vpack.c.b16 %v162, %v154
  %v203 = vpack.c.b16 %v163, %v155
  %v204 = vpack.c.b16 %v164, %v156
  %v205 = vpack.c.b16 %v165, %v157
  %v206 = vpack.c.b16 %v166, %v158
  %v207 = vpack.c.b16 %v167, %v159
  %v208 = vpack.c.b16 %v168, %v160
  %v209 = vpack.c.b16 %v169, %v161
  %v210 = vpack.c.b16 %v178, %v170
  %v211 = vpack.c.b16 %v179, %v171
  %v212 = vpack.c.b16 %v180, %v172
  %v213 = vpack.c.b16 %v181, %v173
  %v214 = vpack.c.b16 %v182, %v174
  %v215 = vpack.c.b16 %v183, %v175
  %v216 = vpack.c.b16 %v184, %v176
  %v217 = vpack.c.b16 %v185, %v177
  %vm250 = vcmask 523264
  %v252 = vsel %vm250, %v15, 0
  %254 = vmatprep.subr.bf16.mxu0 %v187
  %255 = vmatpush1.bf16.msra.mxu0 %v186
  %256 = vmatprep.subr.bf16.mxu0 %v195
  %257 = vmatpush1.bf16.msra.mxu0 %v194
  %258 = vmatprep.subr.bf16.mxu0 %v203
  %259 = vmatpush1.bf16.msra.mxu0 %v202
  %260 = vmatprep.subr.bf16.mxu0 %v211
  %261 = vmatpush1.bf16.msra.mxu0 %v210
  %262 = vmatprep.subr.bf16.mxu0 0
  %263 = vmatpush1.bf16.msra.mxu0 0
  %264 = vmatprep.subr.bf16.mxu0 0
  %265 = vmatpush1.bf16.msra.mxu0 0
  %266 = vmatprep.subr.bf16.mxu0 0
  %267 = vmatpush1.bf16.msra.mxu0 0
  %268 = vmatprep.subr.bf16.mxu0 0
  %269 = vmatpush1.bf16.msra.mxu0 0
  %270 = vmatprep.subr.bf16.mxu0 0
  %271 = vmatpush1.bf16.msra.mxu0 0
  %272 = vmatprep.subr.bf16.mxu0 0
  %273 = vmatpush1.bf16.msra.mxu0 0
  %274 = vmatprep.subr.bf16.mxu0 0
  %275 = vmatpush1.bf16.msra.mxu0 0
  %276 = vmatprep.subr.bf16.mxu0 0
  %277 = vmatpush1.bf16.msra.mxu0 0
  %278 = vmatprep.subr.bf16.mxu0 0
  %279 = vmatpush1.bf16.msra.mxu0 0
  %280 = vmatprep.subr.bf16.mxu0 0
  %281 = vmatpush1.bf16.msra.mxu0 0
  %282 = vmatprep.subr.bf16.mxu0 0
  %283 = vmatpush1.bf16.msra.mxu0 0
  %284 = vmatprep.subr.bf16.mxu0 0
  %285 = vmatpush1.bf16.msra.mxu0 0
  %286 = vmatprep.mubr.bf16.mxu0 0
  %287 = vmatmul.mubr.bf16.gmra.mrb[0].mxu0 %v252
  %v288 = vpop.f32.mrb[0].mxu0
  %v289 = vadd.f32 %v53, %v288
  %v290 = vpop.f32.mrb[0].mxu0
  %v291 = vadd.f32 %v57, %v290
  %v292 = vpop.f32.mrb[0].mxu0
  %v293 = vpop.f32.mrb[0].mxu0
  %294 = vdwg.mxu0
  %295 = vmatprep.subr.bf16.mxu0 %v189
  %296 = vmatpush1.bf16.msra.mxu0 %v188
  %297 = vmatprep.subr.bf16.mxu0 %v197
  %298 = vmatpush1.bf16.msra.mxu0 %v196
  %299 = vmatprep.subr.bf16.mxu0 %v205
  %300 = vmatpush1.bf16.msra.mxu0 %v204
  %301 = vmatprep.subr.bf16.mxu0 %v213
  %302 = vmatpush1.bf16.msra.mxu0 %v212
  %303 = vmatprep.subr.bf16.mxu0 0
  %304 = vmatpush1.bf16.msra.mxu0 0
  %305 = vmatprep.subr.bf16.mxu0 0
  %306 = vmatpush1.bf16.msra.mxu0 0
  %307 = vmatprep.subr.bf16.mxu0 0
  %308 = vmatpush1.bf16.msra.mxu0 0
  %309 = vmatprep.subr.bf16.mxu0 0
  %310 = vmatpush1.bf16.msra.mxu0 0
  %311 = vmatprep.subr.bf16.mxu0 0
  %312 = vmatpush1.bf16.msra.mxu0 0
  %313 = vmatprep.subr.bf16.mxu0 0
  %314 = vmatpush1.bf16.msra.mxu0 0
  %315 = vmatprep.subr.bf16.mxu0 0
  %316 = vmatpush1.bf16.msra.mxu0 0
  %317 = vmatprep.subr.bf16.mxu0 0
  %318 = vmatpush1.bf16.msra.mxu0 0
  %319 = vmatprep.subr.bf16.mxu0 0
  %320 = vmatpush1.bf16.msra.mxu0 0
  %321 = vmatprep.subr.bf16.mxu0 0
  %322 = vmatpush1.bf16.msra.mxu0 0
  %323 = vmatprep.subr.bf16.mxu0 0
  %324 = vmatpush1.bf16.msra.mxu0 0
  %325 = vmatprep.subr.bf16.mxu0 0
  %326 = vmatpush1.bf16.msra.mxu0 0
  %327 = vmatprep.mubr.bf16.mxu0 0
  %328 = vmatmul.mubr.bf16.gmra.mrb[0].mxu0 %v252
  %v329 = vpop.f32.mrb[0].mxu0
  %v330 = vadd.f32 %v61, %v329
  %v331 = vpop.f32.mrb[0].mxu0
  %v332 = vadd.f32 %v65, %v331
  %v333 = vpop.f32.mrb[0].mxu0
  %v334 = vpop.f32.mrb[0].mxu0
  %335 = vdwg.mxu0
  %336 = vmatprep.subr.bf16.mxu0 %v191
  %337 = vmatpush1.bf16.msra.mxu0 %v190
  %338 = vmatprep.subr.bf16.mxu0 %v199
  %339 = vmatpush1.bf16.msra.mxu0 %v198
  %340 = vmatprep.subr.bf16.mxu0 %v207
  %341 = vmatpush1.bf16.msra.mxu0 %v206
  %342 = vmatprep.subr.bf16.mxu0 %v215
  %343 = vmatpush1.bf16.msra.mxu0 %v214
  %344 = vmatprep.subr.bf16.mxu0 0
  %345 = vmatpush1.bf16.msra.mxu0 0
  %346 = vmatprep.subr.bf16.mxu0 0
  %347 = vmatpush1.bf16.msra.mxu0 0
  %348 = vmatprep.subr.bf16.mxu0 0
  %349 = vmatpush1.bf16.msra.mxu0 0
  %350 = vmatprep.subr.bf16.mxu0 0
  %351 = vmatpush1.bf16.msra.mxu0 0
  %352 = vmatprep.subr.bf16.mxu0 0
  %353 = vmatpush1.bf16.msra.mxu0 0
  %354 = vmatprep.subr.bf16.mxu0 0
  %355 = vmatpush1.bf16.msra.mxu0 0
  %356 = vmatprep.subr.bf16.mxu0 0
  %357 = vmatpush1.bf16.msra.mxu0 0
  %358 = vmatprep.subr.bf16.mxu0 0
  %359 = vmatpush1.bf16.msra.mxu0 0
  %360 = vmatprep.subr.bf16.mxu0 0
  %361 = vmatpush1.bf16.msra.mxu0 0
  %362 = vmatprep.subr.bf16.mxu0 0
  %363 = vmatpush1.bf16.msra.mxu0 0
  %364 = vmatprep.subr.bf16.mxu0 0
  %365 = vmatpush1.bf16.msra.mxu0 0
  %366 = vmatprep.subr.bf16.mxu0 0
  %367 = vmatpush1.bf16.msra.mxu0 0
  %368 = vmatprep.mubr.bf16.mxu0 0
  %369 = vmatmul.mubr.bf16.gmra.mrb[0].mxu0 %v252
  %v370 = vpop.f32.mrb[0].mxu0
  %v371 = vadd.f32 %v69, %v370
  %v372 = vpop.f32.mrb[0].mxu0
  %v373 = vadd.f32 %v73, %v372
  %v374 = vpop.f32.mrb[0].mxu0
  %v375 = vpop.f32.mrb[0].mxu0
  %376 = vdwg.mxu0
  %377 = vmatprep.subr.bf16.mxu0 %v193
  %378 = vmatpush1.bf16.msra.mxu0 %v192
  %379 = vmatprep.subr.bf16.mxu0 %v201
  %380 = vmatpush1.bf16.msra.mxu0 %v200
  %381 = vmatprep.subr.bf16.mxu0 %v209
  %382 = vmatpush1.bf16.msra.mxu0 %v208
  %383 = vmatprep.subr.bf16.mxu0 %v217
  %384 = vmatpush1.bf16.msra.mxu0 %v216
  %385 = vmatprep.subr.bf16.mxu0 0
  %386 = vmatpush1.bf16.msra.mxu0 0
  %387 = vmatprep.subr.bf16.mxu0 0
  %388 = vmatpush1.bf16.msra.mxu0 0
  %389 = vmatprep.subr.bf16.mxu0 0
  %390 = vmatpush1.bf16.msra.mxu0 0
  %391 = vmatprep.subr.bf16.mxu0 0
  %392 = vmatpush1.bf16.msra.mxu0 0
  %393 = vmatprep.subr.bf16.mxu0 0
  %394 = vmatpush1.bf16.msra.mxu0 0
  %395 = vmatprep.subr.bf16.mxu0 0
  %396 = vmatpush1.bf16.msra.mxu0 0
  %397 = vmatprep.subr.bf16.mxu0 0
  %398 = vmatpush1.bf16.msra.mxu0 0
  %399 = vmatprep.subr.bf16.mxu0 0
  %400 = vmatpush1.bf16.msra.mxu0 0
  %401 = vmatprep.subr.bf16.mxu0 0
  %402 = vmatpush1.bf16.msra.mxu0 0
  %403 = vmatprep.subr.bf16.mxu0 0
  %404 = vmatpush1.bf16.msra.mxu0 0
  %405 = vmatprep.subr.bf16.mxu0 0
  %406 = vmatpush1.bf16.msra.mxu0 0
  %407 = vmatprep.subr.bf16.mxu0 0
  %408 = vmatpush1.bf16.msra.mxu0 0
  %409 = vmatprep.mubr.bf16.mxu0 0
  %410 = vmatmul.mubr.bf16.gmra.mrb[0].mxu0 %v252
  %v411 = vpop.f32.mrb[0].mxu0
  %v412 = vadd.f32 %v77, %v411
  %v413 = vpop.f32.mrb[0].mxu0
  %v414 = vadd.f32 %v81, %v413
  %v415 = vpop.f32.mrb[0].mxu0
  %v416 = vpop.f32.mrb[0].mxu0
  %417 = vdwg.mxu0
  %v418 = vmax.f32 %v289, 0.0
  %v419 = vmax.f32 %v291, 0.0
  %v420 = vmax.f32 %v330, 0.0
  %v421 = vmax.f32 %v332, 0.0
  %v422 = vmax.f32 %v371, 0.0
  %v423 = vmax.f32 %v373, 0.0
  %v424 = vmax.f32 %v412, 0.0
  %v425 = vmax.f32 %v414, 0.0
  %v426 = vpack.c.bf16 %v418, %v418
  %v427 = vpack.c.bf16 %v419, %v419
  %v428 = vpack.c.bf16 %v420, %v420
  %v429 = vpack.c.bf16 %v421, %v421
  %v430 = vpack.c.bf16 %v422, %v422
  %v431 = vpack.c.bf16 %v423, %v423
  %v432 = vpack.c.bf16 %v424, %v424
  %v433 = vpack.c.bf16 %v425, %v425
  %v442 = vunpack.c.l.b16 %v426
  %v443 = vunpack.c.l.b16 %v427
  %v444 = vunpack.c.l.b16 %v428
  %v445 = vunpack.c.l.b16 %v429
  %v446 = vunpack.c.l.b16 %v430
  %v447 = vunpack.c.l.b16 %v431
  %v448 = vunpack.c.l.b16 %v432
  %v449 = vunpack.c.l.b16 %v433
  %v450 = vpack.c.b16 %v443, %v442
  %v451 = vpack.c.b16 %v445, %v444
  %v452 = vpack.c.b16 %v447, %v446
  %v453 = vpack.c.b16 %v449, %v448
  %458 = vst [vmem:[%s3] sm:$0xff] %v450
  %459 = vst [vmem:[%s3 + $0x8] sm:$0xff] %v451
  %460 = vst [vmem:[%s3 + $0x10] sm:$0xff] %v452
  %461 = vst [vmem:[%s3 + $0x18] sm:$0xff] %v453
  // Predicated region
  $region14: #{_lambda_.22} parent=0 // pred_check
    _
  $region15: #{_lambda_.22} parent=0 // pred_check_branch
    %463 = sbr.rel (0) target = $region17
  $region16: #{_lambda_.22} parent=0 // pred_region
    _
  $region17: #{_lambda_.22} parent=0 // pred_fallthru
    _
  // Predicated region
  $region18: #{_lambda_.22} parent=0 // pred_check
    _
  $region19: #{_lambda_.22} parent=0 // pred_check_branch
    %465 = sbr.rel (0) target = $region21
  $region20: #{_lambda_.22} parent=0 // pred_region
    _
  $region21: #{_lambda_.22} parent=0 // pred_fallthru
    _

// kernel: _lambda_.18
$region0: #{_lambda_.18}
  #allocation0 [shape = 'u32[]', space=smem, size = 0x4, offset = 0x4, fixed_abs, tag = 'smem constant byte address 0x4 - core index']
  #allocation1 [shape = 'u32[144,128]{1,0:T(1,128)}', space=vmem, size = 0x12000, scoped, tag = 'internal scratch']
  %s0 = inlined_call_operand.vmem [shape: bf16[32,32], index: 0, kind: input, shape index: {}]
  %s1 = inlined_call_operand.vmem [shape: bf16[32,256], index: 1, kind: input, shape index: {}]
  %s2 = inlined_call_operand.vmem [shape: f32[1,256], index: 2, kind: input, shape index: {}]
  %s3 = inlined_call_operand.vmem [shape: bf16[32,256], index: 3, kind: output, shape index: {}]
  %s4 = sld [smem:[#allocation0]]
  $region22: #{_lambda_.18} parent=0
    _
  %s6 = ssub.s32 1, %s4
  %s7 = scalar_select 0, %s6, %s4
  // Predicated region
  $region2: #{_lambda_.18} parent=0 // pred_check
    _
  $region3: #{_lambda_.18} parent=0 // pred_check_branch
    %9 = sbr.rel (0) target = $region5
  $region4: #{_lambda_.18} parent=0 // pred_region
    _
  $region5: #{_lambda_.18} parent=0 // pred_fallthru
    _
  // Predicated region
  $region6: #{_lambda_.18} parent=0 // pred_check
    _
  $region7: #{_lambda_.18} parent=0 // pred_check_branch
    %11 = sbr.rel (0) target = $region9
  $region8: #{_lambda_.18} parent=0 // pred_region
    _
  $region9: #{_lambda_.18} parent=0 // pred_fallthru
    _
  // Predicated region
  $region10: #{_lambda_.18} parent=0 // pred_check
    _
  $region11: #{_lambda_.18} parent=0 // pred_check_branch
    %13 = sbr.rel (0) target = $region13
  $region12: #{_lambda_.18} parent=0 // pred_region
    _
  $region13: #{_lambda_.18} parent=0 // pred_fallthru
    _
  %v15 = vld [vmem:[%s0] sm:$0xf]
  %v16 = vld [vmem:[%s0 + $0x4] sm:$0xf]
  %v17 = vld [vmem:[%s0 + $0x8] sm:$0xf]
  %v18 = vld [vmem:[%s0 + $0xc] sm:$0xf]
  %v19 = vld [vmem:[%s1] sm:$0xff]
  %v20 = vld [vmem:[%s1 + $0x8] sm:$0xff]
  %v21 = vld [vmem:[%s1 + $0x10] sm:$0xff]
  %v22 = vld [vmem:[%s1 + $0x18] sm:$0xff]
  %v23 = vld [vmem:[%s2] sm:$0x3]
  %v25 = vlaneseq
  %v26 = vshrl.u32 %v25, 7
  %v27 = vsub.s32 0, %v26
  %v28 = vrot.slane %v23, %v27
  %v29 = vlaneseq
  %v30 = vshrl.u32 %v29, 7
  %v31 = vsub.s32 1, %v30
  %v32 = vrot.slane %v23, %v31
  %v39 = vunpack.c.l.b16 %v15
  %v40 = vunpack.c.l.b16 %v16
  %v41 = vunpack.c.l.b16 %v17
  %v42 = vunpack.c.l.b16 %v18
  %v43 = vpack.c.b16 %v40, %v39
  %v44 = vpack.c.b16 %v42, %v41
  %v49 = vunpack.c.l.b16 %v19
  %v50 = vunpack.c.h.b16 %v19
  %v51 = vunpack.c.l.b16 %v20
  %v52 = vunpack.c.h.b16 %v20
  %v53 = vunpack.c.l.b16 %v21
  %v54 = vunpack.c.h.b16 %v21
  %v55 = vunpack.c.l.b16 %v22
  %v56 = vunpack.c.h.b16 %v22
  %v57 = vpack.c.b16 %v51, %v49
  %v58 = vpack.c.b16 %v52, %v50
  %v59 = vpack.c.b16 %v55, %v53
  %v60 = vpack.c.b16 %v56, %v54
  %vm65 = vcmask 261120
  %v67 = vsel %vm65, %v43, 0
  %v70 = vsel %vm65, %v44, 0
  %72 = vmatprep.subr.bf16.mxu0 %v58
  %73 = vmatpush1.bf16.msra.mxu0 %v57
  %74 = vmatprep.subr.bf16.mxu0 %v60
  %75 = vmatpush1.bf16.msra.mxu0 %v59
  %76 = vmatprep.subr.bf16.mxu0 0
  %77 = vmatpush1.bf16.msra.mxu0 0
  %78 = vmatprep.subr.bf16.mxu0 0
  %79 = vmatpush1.bf16.msra.mxu0 0
  %80 = vmatprep.subr.bf16.mxu0 0
  %81 = vmatpush1.bf16.msra.mxu0 0
  %82 = vmatprep.subr.bf16.mxu0 0
  %83 = vmatpush1.bf16.msra.mxu0 0
  %84 = vmatprep.subr.bf16.mxu0 0
  %85 = vmatpush1.bf16.msra.mxu0 0
  %86 = vmatprep.subr.bf16.mxu0 0
  %87 = vmatpush1.bf16.msra.mxu0 0
  %88 = vmatprep.subr.bf16.mxu0 0
  %89 = vmatpush1.bf16.msra.mxu0 0
  %90 = vmatprep.subr.bf16.mxu0 0
  %91 = vmatpush1.bf16.msra.mxu0 0
  %92 = vmatprep.subr.bf16.mxu0 0
  %93 = vmatpush1.bf16.msra.mxu0 0
  %94 = vmatprep.subr.bf16.mxu0 0
  %95 = vmatpush1.bf16.msra.mxu0 0
  %96 = vmatprep.subr.bf16.mxu0 0
  %97 = vmatpush1.bf16.msra.mxu0 0
  %98 = vmatprep.subr.bf16.mxu0 0
  %99 = vmatpush1.bf16.msra.mxu0 0
  %100 = vmatprep.subr.bf16.mxu0 0
  %101 = vmatpush1.bf16.msra.mxu0 0
  %102 = vmatprep.subr.bf16.mxu0 0
  %103 = vmatpush1.bf16.msra.mxu0 0
  %104 = vmatprep.mubr.bf16.mxu0 0
  %105 = vmatmul.mubr.bf16.gmra.mrb[0].mxu0 %v67
  %v106 = vpop.f32.mrb[0].mxu0
  %v107 = vadd.f32 %v28, %v106
  %v108 = vpop.f32.mrb[0].mxu0
  %v109 = vadd.f32 %v32, %v108
  %v110 = vpop.f32.mrb[0].mxu0
  %v111 = vadd.f32 %v28, %v110
  %v112 = vpop.f32.mrb[0].mxu0
  %v113 = vadd.f32 %v32, %v112
  %114 = vmatprep.mubr.bf16.mxu0 0
  %115 = vmatmul.mubr.bf16.gmra.mrb[0].mxu0 %v70
  %v116 = vpop.f32.mrb[0].mxu0
  %v117 = vadd.f32 %v28, %v116
  %v118 = vpop.f32.mrb[0].mxu0
  %v119 = vadd.f32 %v32, %v118
  %v120 = vpop.f32.mrb[0].mxu0
  %v121 = vadd.f32 %v28, %v120
  %v122 = vpop.f32.mrb[0].mxu0
  %v123 = vadd.f32 %v32, %v122
  %124 = vdwg.mxu0
  %v125 = vmax.f32 %v107, 0.0
  %v126 = vmax.f32 %v109, 0.0
  %v127 = vmax.f32 %v111, 0.0
  %v128 = vmax.f32 %v113, 0.0
  %v129 = vmax.f32 %v117, 0.0
  %v130 = vmax.f32 %v119, 0.0
  %v131 = vmax.f32 %v121, 0.0
  %v132 = vmax.f32 %v123, 0.0
  %v133 = vpack.c.bf16 %v127, %v125
  %v134 = vpack.c.bf16 %v128, %v126
  %v135 = vpack.c.bf16 %v131, %v129
  %v136 = vpack.c.bf16 %v132, %v130
  %v141 = vunpack.c.l.b16 %v133
  %v142 = vunpack.c.l.b16 %v134
  %v143 = vunpack.c.h.b16 %v133
  %v144 = vunpack.c.h.b16 %v134
  %v145 = vunpack.c.l.b16 %v135
  %v146 = vunpack.c.l.b16 %v136
  %v147 = vunpack.c.h.b16 %v135
  %v148 = vunpack.c.h.b16 %v136
  %v149 = vpack.c.b16 %v142, %v141
  %v150 = vpack.c.b16 %v144, %v143
  %v151 = vpack.c.b16 %v146, %v145
  %v152 = vpack.c.b16 %v148, %v147
  %157 = vst [vmem:[%s3] sm:$0xff] %v149
  %158 = vst [vmem:[%s3 + $0x8] sm:$0xff] %v150
  %159 = vst [vmem:[%s3 + $0x10] sm:$0xff] %v151
  %160 = vst [vmem:[%s3 + $0x18] sm:$0xff] %v152
  // Predicated region
  $region14: #{_lambda_.18} parent=0 // pred_check
    _
  $region15: #{_lambda_.18} parent=0 // pred_check_branch
    %162 = sbr.rel (0) target = $region17
  $region16: #{_lambda_.18} parent=0 // pred_region
    _
  $region17: #{_lambda_.18} parent=0 // pred_fallthru
    _
  // Predicated region
  $region18: #{_lambda_.18} parent=0 // pred_check
    _
  $region19: #{_lambda_.18} parent=0 // pred_check_branch
    %164 = sbr.rel (0) target = $region21
  $region20: #{_lambda_.18} parent=0 // pred_region
    _
  $region21: #{_lambda_.18} parent=0 // pred_fallthru
    _

// kernel: _lambda_.14
$region0: #{_lambda_.14}
  #allocation0 [shape = 'u32[]', space=smem, size = 0x4, offset = 0x4, fixed_abs, tag = 'smem constant byte address 0x4 - core index']
  #allocation1 [shape = 'u32[144,128]{1,0:T(1,128)}', space=vmem, size = 0x12000, scoped, tag = 'internal scratch']
  %s0 = inlined_call_operand.vmem [shape: bf16[128,32], index: 0, kind: input, shape index: {}]
  %s1 = inlined_call_operand.vmem [shape: bf16[32,64], index: 1, kind: input, shape index: {}]
  %s2 = inlined_call_operand.vmem [shape: f32[1,64], index: 2, kind: input, shape index: {}]
  %s3 = inlined_call_operand.vmem [shape: bf16[128,64], index: 3, kind: output, shape index: {}]
  %s4 = sld [smem:[#allocation0]]
  $region22: #{_lambda_.14} parent=0
    _
  %s6 = ssub.s32 1, %s4
  %s7 = scalar_select 0, %s6, %s4
  // Predicated region
  $region2: #{_lambda_.14} parent=0 // pred_check
    _
  $region3: #{_lambda_.14} parent=0 // pred_check_branch
    %9 = sbr.rel (0) target = $region5
  $region4: #{_lambda_.14} parent=0 // pred_region
    _
  $region5: #{_lambda_.14} parent=0 // pred_fallthru
    _
  // Predicated region
  $region6: #{_lambda_.14} parent=0 // pred_check
    _
  $region7: #{_lambda_.14} parent=0 // pred_check_branch
    %11 = sbr.rel (0) target = $region9
  $region8: #{_lambda_.14} parent=0 // pred_region
    _
  $region9: #{_lambda_.14} parent=0 // pred_fallthru
    _
  // Predicated region
  $region10: #{_lambda_.14} parent=0 // pred_check
    _
  $region11: #{_lambda_.14} parent=0 // pred_check_branch
    %13 = sbr.rel (0) target = $region13
  $region12: #{_lambda_.14} parent=0 // pred_region
    _
  $region13: #{_lambda_.14} parent=0 // pred_fallthru
    _
  %v15 = vld [vmem:[%s0] sm:$0xf]
  %v16 = vld [vmem:[%s0 + $0x4] sm:$0xf]
  %v17 = vld [vmem:[%s0 + $0x8] sm:$0xf]
  %v18 = vld [vmem:[%s0 + $0xc] sm:$0xf]
  %v19 = vld [vmem:[%s0 + $0x10] sm:$0xf]
  %v20 = vld [vmem:[%s0 + $0x14] sm:$0xf]
  %v21 = vld [vmem:[%s0 + $0x18] sm:$0xf]
  %v22 = vld [vmem:[%s0 + $0x1c] sm:$0xf]
  %v23 = vld [vmem:[%s0 + $0x20] sm:$0xf]
  %v24 = vld [vmem:[%s0 + $0x24] sm:$0xf]
  %v25 = vld [vmem:[%s0 + $0x28] sm:$0xf]
  %v26 = vld [vmem:[%s0 + $0x2c] sm:$0xf]
  %v27 = vld [vmem:[%s0 + $0x30] sm:$0xf]
  %v28 = vld [vmem:[%s0 + $0x34] sm:$0xf]
  %v29 = vld [vmem:[%s0 + $0x38] sm:$0xf]
  %v30 = vld [vmem:[%s0 + $0x3c] sm:$0xf]
  %v31 = vld [vmem:[%s1] sm:$0xf]
  %v32 = vld [vmem:[%s1 + $0x4] sm:$0xf]
  %v33 = vld [vmem:[%s1 + $0x8] sm:$0xf]
  %v34 = vld [vmem:[%s1 + $0xc] sm:$0xf]
  %v35 = vld [vmem:[%s2] sm:$0x1]
  %v37 = vlaneseq
  %v38 = vshrl.u32 %v37, 7
  %v39 = vsub.s32 0, %v38
  %v40 = vrot.slane %v35, %v39
  %v58 = vunpack.c.l.b16 %v15
  %v59 = vunpack.c.l.b16 %v16
  %v60 = vunpack.c.l.b16 %v17
  %v61 = vunpack.c.l.b16 %v18
  %v62 = vunpack.c.l.b16 %v19
  %v63 = vunpack.c.l.b16 %v20
  %v64 = vunpack.c.l.b16 %v21
  %v65 = vunpack.c.l.b16 %v22
  %v66 = vunpack.c.l.b16 %v23
  %v67 = vunpack.c.l.b16 %v24
  %v68 = vunpack.c.l.b16 %v25
  %v69 = vunpack.c.l.b16 %v26
  %v70 = vunpack.c.l.b16 %v27
  %v71 = vunpack.c.l.b16 %v28
  %v72 = vunpack.c.l.b16 %v29
  %v73 = vunpack.c.l.b16 %v30
  %v74 = vpack.c.b16 %v59, %v58
  %v75 = vpack.c.b16 %v61, %v60
  %v76 = vpack.c.b16 %v63, %v62
  %v77 = vpack.c.b16 %v65, %v64
  %v78 = vpack.c.b16 %v67, %v66
  %v79 = vpack.c.b16 %v69, %v68
  %v80 = vpack.c.b16 %v71, %v70
  %v81 = vpack.c.b16 %v73, %v72
  %v86 = vunpack.c.l.b16 %v31
  %v87 = vunpack.c.l.b16 %v32
  %v88 = vunpack.c.l.b16 %v33
  %v89 = vunpack.c.l.b16 %v34
  %v90 = vpack.c.b16 %v87, %v86
  %v91 = vpack.c.b16 %v89, %v88
  %vm94 = vcmask 261120
  %v96 = vsel %vm94, %v74, 0
  %v99 = vsel %vm94, %v75, 0
  %v102 = vsel %vm94, %v76, 0
  %v105 = vsel %vm94, %v77, 0
  %v108 = vsel %vm94, %v78, 0
  %v111 = vsel %vm94, %v79, 0
  %v114 = vsel %vm94, %v80, 0
  %v117 = vsel %vm94, %v81, 0
  %119 = vmatprep.subr.bf16.mxu0 0
  %120 = vmatpush1.bf16.msra.mxu0 %v90
  %121 = vmatprep.subr.bf16.mxu0 0
  %122 = vmatpush1.bf16.msra.mxu0 %v91
  %123 = vmatprep.subr.bf16.mxu0 0
  %124 = vmatpush1.bf16.msra.mxu0 0
  %125 = vmatprep.subr.bf16.mxu0 0
  %126 = vmatpush1.bf16.msra.mxu0 0
  %127 = vmatprep.subr.bf16.mxu0 0
  %128 = vmatpush1.bf16.msra.mxu0 0
  %129 = vmatprep.subr.bf16.mxu0 0
  %130 = vmatpush1.bf16.msra.mxu0 0
  %131 = vmatprep.subr.bf16.mxu0 0
  %132 = vmatpush1.bf16.msra.mxu0 0
  %133 = vmatprep.subr.bf16.mxu0 0
  %134 = vmatpush1.bf16.msra.mxu0 0
  %135 = vmatprep.subr.bf16.mxu0 0
  %136 = vmatpush1.bf16.msra.mxu0 0
  %137 = vmatprep.subr.bf16.mxu0 0
  %138 = vmatpush1.bf16.msra.mxu0 0
  %139 = vmatprep.subr.bf16.mxu0 0
  %140 = vmatpush1.bf16.msra.mxu0 0
  %141 = vmatprep.subr.bf16.mxu0 0
  %142 = vmatpush1.bf16.msra.mxu0 0
  %143 = vmatprep.subr.bf16.mxu0 0
  %144 = vmatpush1.bf16.msra.mxu0 0
  %145 = vmatprep.subr.bf16.mxu0 0
  %146 = vmatpush1.bf16.msra.mxu0 0
  %147 = vmatprep.subr.bf16.mxu0 0
  %148 = vmatpush1.bf16.msra.mxu0 0
  %149 = vmatprep.subr.bf16.mxu0 0
  %150 = vmatpush1.bf16.msra.mxu0 0
  %151 = vmatprep.mubr.bf16.mxu0 0
  %152 = vmatmul.mubr.bf16.gmra.mrb[0].mxu0 %v96
  %v153 = vpop.f32.mrb[0].mxu0
  %v154 = vadd.f32 %v40, %v153
  %v155 = vpop.f32.mrb[0].mxu0
  %v156 = vpop.f32.mrb[0].mxu0
  %v157 = vadd.f32 %v40, %v156
  %v158 = vpop.f32.mrb[0].mxu0
  %159 = vmatprep.mubr.bf16.mxu0 0
  %160 = vmatmul.mubr.bf16.gmra.mrb[0].mxu0 %v99
  %v161 = vpop.f32.mrb[0].mxu0
  %v162 = vadd.f32 %v40, %v161
  %v163 = vpop.f32.mrb[0].mxu0
  %v164 = vpop.f32.mrb[0].mxu0
  %v165 = vadd.f32 %v40, %v164
  %v166 = vpop.f32.mrb[0].mxu0
  %167 = vmatprep.mubr.bf16.mxu0 0
  %168 = vmatmul.mubr.bf16.gmra.mrb[0].mxu0 %v102
  %v169 = vpop.f32.mrb[0].mxu0
  %v170 = vadd.f32 %v40, %v169
  %v171 = vpop.f32.mrb[0].mxu0
  %v172 = vpop.f32.mrb[0].mxu0
  %v173 = vadd.f32 %v40, %v172
  %v174 = vpop.f32.mrb[0].mxu0
  %175 = vmatprep.mubr.bf16.mxu0 0
  %176 = vmatmul.mubr.bf16.gmra.mrb[0].mxu0 %v105
  %v177 = vpop.f32.mrb[0].mxu0
  %v178 = vadd.f32 %v40, %v177
  %v179 = vpop.f32.mrb[0].mxu0
  %v180 = vpop.f32.mrb[0].mxu0
  %v181 = vadd.f32 %v40, %v180
  %v182 = vpop.f32.mrb[0].mxu0
  %183 = vmatprep.mubr.bf16.mxu0 0
  %184 = vmatmul.mubr.bf16.gmra.mrb[0].mxu0 %v108
  %v185 = vpop.f32.mrb[0].mxu0
  %v186 = vadd.f32 %v40, %v185
  %v187 = vpop.f32.mrb[0].mxu0
  %v188 = vpop.f32.mrb[0].mxu0
  %v189 = vadd.f32 %v40, %v188
  %v190 = vpop.f32.mrb[0].mxu0
  %191 = vmatprep.mubr.bf16.mxu0 0
  %192 = vmatmul.mubr.bf16.gmra.mrb[0].mxu0 %v111
  %v193 = vpop.f32.mrb[0].mxu0
  %v194 = vadd.f32 %v40, %v193
  %v195 = vpop.f32.mrb[0].mxu0
  %v196 = vpop.f32.mrb[0].mxu0
  %v197 = vadd.f32 %v40, %v196
  %v198 = vpop.f32.mrb[0].mxu0
  %199 = vmatprep.mubr.bf16.mxu0 0
  %200 = vmatmul.mubr.bf16.gmra.mrb[0].mxu0 %v114
  %v201 = vpop.f32.mrb[0].mxu0
  %v202 = vadd.f32 %v40, %v201
  %v203 = vpop.f32.mrb[0].mxu0
  %v204 = vpop.f32.mrb[0].mxu0
  %v205 = vadd.f32 %v40, %v204
  %v206 = vpop.f32.mrb[0].mxu0
  %207 = vmatprep.mubr.bf16.mxu0 0
  %208 = vmatmul.mubr.bf16.gmra.mrb[0].mxu0 %v117
  %v209 = vpop.f32.mrb[0].mxu0
  %v210 = vadd.f32 %v40, %v209
  %v211 = vpop.f32.mrb[0].mxu0
  %v212 = vpop.f32.mrb[0].mxu0
  %v213 = vadd.f32 %v40, %v212
  %v214 = vpop.f32.mrb[0].mxu0
  %215 = vdwg.mxu0
  %v216 = vmax.f32 %v154, 0.0
  %v217 = vmax.f32 %v157, 0.0
  %v218 = vmax.f32 %v162, 0.0
  %v219 = vmax.f32 %v165, 0.0
  %v220 = vmax.f32 %v170, 0.0
  %v221 = vmax.f32 %v173, 0.0
  %v222 = vmax.f32 %v178, 0.0
  %v223 = vmax.f32 %v181, 0.0
  %v224 = vmax.f32 %v186, 0.0
  %v225 = vmax.f32 %v189, 0.0
  %v226 = vmax.f32 %v194, 0.0
  %v227 = vmax.f32 %v197, 0.0
  %v228 = vmax.f32 %v202, 0.0
  %v229 = vmax.f32 %v205, 0.0
  %v230 = vmax.f32 %v210, 0.0
  %v231 = vmax.f32 %v213, 0.0
  %v232 = vpack.c.bf16 %v217, %v216
  %v233 = vpack.c.bf16 %v219, %v218
  %v234 = vpack.c.bf16 %v221, %v220
  %v235 = vpack.c.bf16 %v223, %v222
  %v236 = vpack.c.bf16 %v225, %v224
  %v237 = vpack.c.bf16 %v227, %v226
  %v238 = vpack.c.bf16 %v229, %v228
  %v239 = vpack.c.bf16 %v231, %v230
  %v248 = vunpack.c.l.b16 %v232
  %v249 = vunpack.c.h.b16 %v232
  %v250 = vunpack.c.l.b16 %v233
  %v251 = vunpack.c.h.b16 %v233
  %v252 = vunpack.c.l.b16 %v234
  %v253 = vunpack.c.h.b16 %v234
  %v254 = vunpack.c.l.b16 %v235
  %v255 = vunpack.c.h.b16 %v235
  %v256 = vunpack.c.l.b16 %v236
  %v257 = vunpack.c.h.b16 %v236
  %v258 = vunpack.c.l.b16 %v237
  %v259 = vunpack.c.h.b16 %v237
  %v260 = vunpack.c.l.b16 %v238
  %v261 = vunpack.c.h.b16 %v238
  %v262 = vunpack.c.l.b16 %v239
  %v263 = vunpack.c.h.b16 %v239
  %v264 = vpack.c.b16 %v248, %v248
  %v265 = vpack.c.b16 %v249, %v249
  %v266 = vpack.c.b16 %v250, %v250
  %v267 = vpack.c.b16 %v251, %v251
  %v268 = vpack.c.b16 %v252, %v252
  %v269 = vpack.c.b16 %v253, %v253
  %v270 = vpack.c.b16 %v254, %v254
  %v271 = vpack.c.b16 %v255, %v255
  %v272 = vpack.c.b16 %v256, %v256
  %v273 = vpack.c.b16 %v257, %v257
  %v274 = vpack.c.b16 %v258, %v258
  %v275 = vpack.c.b16 %v259, %v259
  %v276 = vpack.c.b16 %v260, %v260
  %v277 = vpack.c.b16 %v261, %v261
  %v278 = vpack.c.b16 %v262, %v262
  %v279 = vpack.c.b16 %v263, %v263
  %vm296 = vcmask 519168
  %297 = vst.msk [vmem:[%s3] sm:$0xf] %vm296, %v264
  %298 = vst.msk [vmem:[%s3 + $0x4] sm:$0xf] %vm296, %v265
  %299 = vst.msk [vmem:[%s3 + $0x8] sm:$0xf] %vm296, %v266
  %300 = vst.msk [vmem:[%s3 + $0xc] sm:$0xf] %vm296, %v267
  %301 = vst.msk [vmem:[%s3 + $0x10] sm:$0xf] %vm296, %v268
  %302 = vst.msk [vmem:[%s3 + $0x14] sm:$0xf] %vm296, %v269
  %303 = vst.msk [vmem:[%s3 + $0x18] sm:$0xf] %vm296, %v270
  %304 = vst.msk [vmem:[%s3 + $0x1c] sm:$0xf] %vm296, %v271
  %305 = vst.msk [vmem:[%s3 + $0x20] sm:$0xf] %vm296, %v272
  %306 = vst.msk [vmem:[%s3 + $0x24] sm:$0xf] %vm296, %v273
  %307 = vst.msk [vmem:[%s3 + $0x28] sm:$0xf] %vm296, %v274
  %308 = vst.msk [vmem:[%s3 + $0x2c] sm:$0xf] %vm296, %v275
  %309 = vst.msk [vmem:[%s3 + $0x30] sm:$0xf] %vm296, %v276
  %310 = vst.msk [vmem:[%s3 + $0x34] sm:$0xf] %vm296, %v277
  %311 = vst.msk [vmem:[%s3 + $0x38] sm:$0xf] %vm296, %v278
  %312 = vst.msk [vmem:[%s3 + $0x3c] sm:$0xf] %vm296, %v279
  // Predicated region
  $region14: #{_lambda_.14} parent=0 // pred_check
    _
  $region15: #{_lambda_.14} parent=0 // pred_check_branch
    %314 = sbr.rel (0) target = $region17
  $region16: #{_lambda_.14} parent=0 // pred_region
    _
  $region17: #{_lambda_.14} parent=0 // pred_fallthru
    _
  // Predicated region
  $region18: #{_lambda_.14} parent=0 // pred_check
    _
  $region19: #{_lambda_.14} parent=0 // pred_check_branch
    %316 = sbr.rel (0) target = $region21
  $region20: #{_lambda_.14} parent=0 // pred_region
    _
  $region21: #{_lambda_.14} parent=0 // pred_fallthru
    _

// kernel: _lambda_.23
$region0: #{_lambda_.23}
  #allocation0 [shape = 'u32[]', space=smem, size = 0x4, offset = 0x4, fixed_abs, tag = 'smem constant byte address 0x4 - core index']
  #allocation1 [shape = 'u32[144,128]{1,0:T(1,128)}', space=vmem, size = 0x12000, scoped, tag = 'internal scratch']
  %s0 = inlined_call_operand.vmem [shape: bf16[128,192], index: 0, kind: input, shape index: {}]
  %s1 = inlined_call_operand.vmem [shape: bf16[192,128], index: 1, kind: input, shape index: {}]
  %s2 = inlined_call_operand.vmem [shape: f32[1,128], index: 2, kind: input, shape index: {}]
  %s3 = inlined_call_operand.vmem [shape: f32[128,128], index: 3, kind: output, shape index: {}]
  %s4 = sld [smem:[#allocation0]]
  $region22: #{_lambda_.23} parent=0
    _
  %s6 = ssub.s32 1, %s4
  %s7 = scalar_select 0, %s6, %s4
  // Predicated region
  $region2: #{_lambda_.23} parent=0 // pred_check
    _
  $region3: #{_lambda_.23} parent=0 // pred_check_branch
    %9 = sbr.rel (0) target = $region5
  $region4: #{_lambda_.23} parent=0 // pred_region
    _
  $region5: #{_lambda_.23} parent=0 // pred_fallthru
    _
  // Predicated region
  $region6: #{_lambda_.23} parent=0 // pred_check
    _
  $region7: #{_lambda_.23} parent=0 // pred_check_branch
    %11 = sbr.rel (0) target = $region9
  $region8: #{_lambda_.23} parent=0 // pred_region
    _
  $region9: #{_lambda_.23} parent=0 // pred_fallthru
    _
  // Predicated region
  $region10: #{_lambda_.23} parent=0 // pred_check
    _
  $region11: #{_lambda_.23} parent=0 // pred_check_branch
    %13 = sbr.rel (0) target = $region13
  $region12: #{_lambda_.23} parent=0 // pred_region
    _
  $region13: #{_lambda_.23} parent=0 // pred_fallthru
    _
  %v15 = vld [vmem:[%s0] sm:$0xff]
  %v16 = vld [vmem:[%s0 + $0x8] sm:$0xff]
  %v17 = vld [vmem:[%s0 + $0x10] sm:$0xff]
  %v18 = vld [vmem:[%s0 + $0x18] sm:$0xff]
  %v19 = vld [vmem:[%s0 + $0x20] sm:$0xff]
  %v20 = vld [vmem:[%s0 + $0x28] sm:$0xff]
  %v21 = vld [vmem:[%s0 + $0x30] sm:$0xff]
  %v22 = vld [vmem:[%s0 + $0x38] sm:$0xff]
  %v23 = vld [vmem:[%s0 + $0x40] sm:$0xff]
  %v24 = vld [vmem:[%s0 + $0x48] sm:$0xff]
  %v25 = vld [vmem:[%s0 + $0x50] sm:$0xff]
  %v26 = vld [vmem:[%s0 + $0x58] sm:$0xff]
  %v27 = vld [vmem:[%s0 + $0x60] sm:$0xff]
  %v28 = vld [vmem:[%s0 + $0x68] sm:$0xff]
  %v29 = vld [vmem:[%s0 + $0x70] sm:$0xff]
  %v30 = vld [vmem:[%s0 + $0x78] sm:$0xff]
  %v31 = vld [vmem:[%s1] sm:$0xf]
  %v32 = vld [vmem:[%s1 + $0x4] sm:$0xf]
  %v33 = vld [vmem:[%s1 + $0x8] sm:$0xf]
  %v34 = vld [vmem:[%s1 + $0xc] sm:$0xf]
  %v35 = vld [vmem:[%s1 + $0x10] sm:$0xf]
  %v36 = vld [vmem:[%s1 + $0x14] sm:$0xf]
  %v37 = vld [vmem:[%s1 + $0x18] sm:$0xf]
  %v38 = vld [vmem:[%s1 + $0x1c] sm:$0xf]
  %v39 = vld [vmem:[%s1 + $0x20] sm:$0xf]
  %v40 = vld [vmem:[%s1 + $0x24] sm:$0xf]
  %v41 = vld [vmem:[%s1 + $0x28] sm:$0xf]
  %v42 = vld [vmem:[%s1 + $0x2c] sm:$0xf]
  %v43 = vld [vmem:[%s1 + $0x30] sm:$0xf]
  %v44 = vld [vmem:[%s1 + $0x34] sm:$0xf]
  %v45 = vld [vmem:[%s1 + $0x38] sm:$0xf]
  %v46 = vld [vmem:[%s1 + $0x3c] sm:$0xf]
  %v47 = vld [vmem:[%s1 + $0x40] sm:$0xf]
  %v48 = vld [vmem:[%s1 + $0x44] sm:$0xf]
  %v49 = vld [vmem:[%s1 + $0x48] sm:$0xf]
  %v50 = vld [vmem:[%s1 + $0x4c] sm:$0xf]
  %v51 = vld [vmem:[%s1 + $0x50] sm:$0xf]
  %v52 = vld [vmem:[%s1 + $0x54] sm:$0xf]
  %v53 = vld [vmem:[%s1 + $0x58] sm:$0xf]
  %v54 = vld [vmem:[%s1 + $0x5c] sm:$0xf]
  %v55 = vld [vmem:[%s2] sm:$0x1]
  %v57 = vlaneseq
  %v58 = vshrl.u32 %v57, 7
  %v59 = vsub.s32 0, %v58
  %v60 = vrot.slane %v55, %v59
  %v78 = vunpack.c.l.b16 %v15
  %v79 = vunpack.c.h.b16 %v15
  %v80 = vunpack.c.l.b16 %v16
  %v81 = vunpack.c.h.b16 %v16
  %v82 = vunpack.c.l.b16 %v17
  %v83 = vunpack.c.h.b16 %v17
  %v84 = vunpack.c.l.b16 %v18
  %v85 = vunpack.c.h.b16 %v18
  %v86 = vunpack.c.l.b16 %v19
  %v87 = vunpack.c.h.b16 %v19
  %v88 = vunpack.c.l.b16 %v20
  %v89 = vunpack.c.h.b16 %v20
  %v90 = vunpack.c.l.b16 %v21
  %v91 = vunpack.c.h.b16 %v21
  %v92 = vunpack.c.l.b16 %v22
  %v93 = vunpack.c.h.b16 %v22
  %v94 = vunpack.c.l.b16 %v23
  %v95 = vunpack.c.h.b16 %v23
  %v96 = vunpack.c.l.b16 %v24
  %v97 = vunpack.c.h.b16 %v24
  %v98 = vunpack.c.l.b16 %v25
  %v99 = vunpack.c.h.b16 %v25
  %v100 = vunpack.c.l.b16 %v26
  %v101 = vunpack.c.h.b16 %v26
  %v102 = vunpack.c.l.b16 %v27
  %v103 = vunpack.c.h.b16 %v27
  %v104 = vunpack.c.l.b16 %v28
  %v105 = vunpack.c.h.b16 %v28
  %v106 = vunpack.c.l.b16 %v29
  %v107 = vunpack.c.h.b16 %v29
  %v108 = vunpack.c.l.b16 %v30
  %v109 = vunpack.c.h.b16 %v30
  %v110 = vpack.c.b16 %v80, %v78
  %v111 = vpack.c.b16 %v81, %v79
  %v112 = vpack.c.b16 %v84, %v82
  %v113 = vpack.c.b16 %v85, %v83
  %v114 = vpack.c.b16 %v88, %v86
  %v115 = vpack.c.b16 %v89, %v87
  %v116 = vpack.c.b16 %v92, %v90
  %v117 = vpack.c.b16 %v93, %v91
  %v118 = vpack.c.b16 %v96, %v94
  %v119 = vpack.c.b16 %v97, %v95
  %v120 = vpack.c.b16 %v100, %v98
  %v121 = vpack.c.b16 %v101, %v99
  %v122 = vpack.c.b16 %v104, %v102
  %v123 = vpack.c.b16 %v105, %v103
  %v124 = vpack.c.b16 %v108, %v106
  %v125 = vpack.c.b16 %v109, %v107
  %v158 = vunpack.c.l.b16 %v31
  %v159 = vunpack.c.l.b16 %v32
  %v160 = vunpack.c.l.b16 %v33
  %v161 = vunpack.c.l.b16 %v34
  %v162 = vunpack.c.l.b16 %v35
  %v163 = vunpack.c.l.b16 %v36
  %v164 = vunpack.c.l.b16 %v37
  %v165 = vunpack.c.l.b16 %v38
  %v166 = vunpack.c.l.b16 %v39
  %v167 = vunpack.c.l.b16 %v40
  %v168 = vunpack.c.l.b16 %v41
  %v169 = vunpack.c.l.b16 %v42
  %v170 = vunpack.c.l.b16 %v43
  %v171 = vunpack.c.l.b16 %v44
  %v172 = vunpack.c.l.b16 %v45
  %v173 = vunpack.c.l.b16 %v46
  %v174 = vunpack.c.l.b16 %v47
  %v175 = vunpack.c.l.b16 %v48
  %v176 = vunpack.c.l.b16 %v49
  %v177 = vunpack.c.l.b16 %v50
  %v178 = vunpack.c.l.b16 %v51
  %v179 = vunpack.c.l.b16 %v52
  %v180 = vunpack.c.l.b16 %v53
  %v181 = vunpack.c.l.b16 %v54
  %v182 = vpack.c.b16 %v159, %v158
  %v183 = vpack.c.b16 %v161, %v160
  %v184 = vpack.c.b16 %v163, %v162
  %v185 = vpack.c.b16 %v165, %v164
  %v186 = vpack.c.b16 %v167, %v166
  %v187 = vpack.c.b16 %v169, %v168
  %v188 = vpack.c.b16 %v171, %v170
  %v189 = vpack.c.b16 %v173, %v172
  %v190 = vpack.c.b16 %v175, %v174
  %v191 = vpack.c.b16 %v177, %v176
  %v192 = vpack.c.b16 %v179, %v178
  %v193 = vpack.c.b16 %v181, %v180
  %vm206 = vcmask 523264
  %v208 = vsel %vm206, %v111, 0
  %v211 = vsel %vm206, %v113, 0
  %v214 = vsel %vm206, %v115, 0
  %v217 = vsel %vm206, %v117, 0
  %v220 = vsel %vm206, %v119, 0
  %v223 = vsel %vm206, %v121, 0
  %v226 = vsel %vm206, %v123, 0
  %v229 = vsel %vm206, %v125, 0
  %231 = vmatprep.subr.bf16.mxu0 0
  %232 = vmatpush1.bf16.msra.mxu0 %v182
  %233 = vmatprep.subr.bf16.mxu0 0
  %234 = vmatpush1.bf16.msra.mxu0 %v183
  %235 = vmatprep.subr.bf16.mxu0 0
  %236 = vmatpush1.bf16.msra.mxu0 %v184
  %237 = vmatprep.subr.bf16.mxu0 0
  %238 = vmatpush1.bf16.msra.mxu0 %v185
  %239 = vmatprep.subr.bf16.mxu0 0
  %240 = vmatpush1.bf16.msra.mxu0 %v186
  %241 = vmatprep.subr.bf16.mxu0 0
  %242 = vmatpush1.bf16.msra.mxu0 %v187
  %243 = vmatprep.subr.bf16.mxu0 0
  %244 = vmatpush1.bf16.msra.mxu0 %v188
  %245 = vmatprep.subr.bf16.mxu0 0
  %246 = vmatpush1.bf16.msra.mxu0 %v189
  %247 = vmatprep.subr.bf16.mxu0 0
  %248 = vmatpush1.bf16.msra.mxu0 %v190
  %249 = vmatprep.subr.bf16.mxu0 0
  %250 = vmatpush1.bf16.msra.mxu0 %v191
  %251 = vmatprep.subr.bf16.mxu0 0
  %252 = vmatpush1.bf16.msra.mxu0 %v192
  %253 = vmatprep.subr.bf16.mxu0 0
  %254 = vmatpush1.bf16.msra.mxu0 %v193
  %255 = vmatprep.subr.bf16.mxu0 0
  %256 = vmatpush1.bf16.msra.mxu0 0
  %257 = vmatprep.subr.bf16.mxu0 0
  %258 = vmatpush1.bf16.msra.mxu0 0
  %259 = vmatprep.subr.bf16.mxu0 0
  %260 = vmatpush1.bf16.msra.mxu0 0
  %261 = vmatprep.subr.bf16.mxu0 0
  %262 = vmatpush1.bf16.msra.mxu0 0
  %263 = vmatprep.mubr.bf16.mxu0 %v208
  %264 = vmatmul.mubr.bf16.gmra.mrb[0].mxu0 %v110
  %v265 = vpop.f32.mrb[0].mxu0
  %v266 = vadd.f32 %v60, %v265
  %v267 = vpop.f32.mrb[0].mxu0
  %v268 = vpop.f32.mrb[0].mxu0
  %v269 = vadd.f32 %v60, %v268
  %v270 = vpop.f32.mrb[0].mxu0
  %271 = vmatprep.mubr.bf16.mxu0 %v211
  %272 = vmatmul.mubr.bf16.gmra.mrb[0].mxu0 %v112
  %v273 = vpop.f32.mrb[0].mxu0
  %v274 = vadd.f32 %v60, %v273
  %v275 = vpop.f32.mrb[0].mxu0
  %v276 = vpop.f32.mrb[0].mxu0
  %v277 = vadd.f32 %v60, %v276
  %v278 = vpop.f32.mrb[0].mxu0
  %279 = vmatprep.mubr.bf16.mxu0 %v214
  %280 = vmatmul.mubr.bf16.gmra.mrb[0].mxu0 %v114
  %v281 = vpop.f32.mrb[0].mxu0
  %v282 = vadd.f32 %v60, %v281
  %v283 = vpop.f32.mrb[0].mxu0
  %v284 = vpop.f32.mrb[0].mxu0
  %v285 = vadd.f32 %v60, %v284
  %v286 = vpop.f32.mrb[0].mxu0
  %287 = vmatprep.mubr.bf16.mxu0 %v217
  %288 = vmatmul.mubr.bf16.gmra.mrb[0].mxu0 %v116
  %v289 = vpop.f32.mrb[0].mxu0
  %v290 = vadd.f32 %v60, %v289
  %v291 = vpop.f32.mrb[0].mxu0
  %v292 = vpop.f32.mrb[0].mxu0
  %v293 = vadd.f32 %v60, %v292
  %v294 = vpop.f32.mrb[0].mxu0
  %295 = vmatprep.mubr.bf16.mxu0 %v220
  %296 = vmatmul.mubr.bf16.gmra.mrb[0].mxu0 %v118
  %v297 = vpop.f32.mrb[0].mxu0
  %v298 = vadd.f32 %v60, %v297
  %v299 = vpop.f32.mrb[0].mxu0
  %v300 = vpop.f32.mrb[0].mxu0
  %v301 = vadd.f32 %v60, %v300
  %v302 = vpop.f32.mrb[0].mxu0
  %303 = vmatprep.mubr.bf16.mxu0 %v223
  %304 = vmatmul.mubr.bf16.gmra.mrb[0].mxu0 %v120
  %v305 = vpop.f32.mrb[0].mxu0
  %v306 = vadd.f32 %v60, %v305
  %v307 = vpop.f32.mrb[0].mxu0
  %v308 = vpop.f32.mrb[0].mxu0
  %v309 = vadd.f32 %v60, %v308
  %v310 = vpop.f32.mrb[0].mxu0
  %311 = vmatprep.mubr.bf16.mxu0 %v226
  %312 = vmatmul.mubr.bf16.gmra.mrb[0].mxu0 %v122
  %v313 = vpop.f32.mrb[0].mxu0
  %v314 = vadd.f32 %v60, %v313
  %v315 = vpop.f32.mrb[0].mxu0
  %v316 = vpop.f32.mrb[0].mxu0
  %v317 = vadd.f32 %v60, %v316
  %v318 = vpop.f32.mrb[0].mxu0
  %319 = vmatprep.mubr.bf16.mxu0 %v229
  %320 = vmatmul.mubr.bf16.gmra.mrb[0].mxu0 %v124
  %v321 = vpop.f32.mrb[0].mxu0
  %v322 = vadd.f32 %v60, %v321
  %v323 = vpop.f32.mrb[0].mxu0
  %v324 = vpop.f32.mrb[0].mxu0
  %v325 = vadd.f32 %v60, %v324
  %v326 = vpop.f32.mrb[0].mxu0
  %327 = vdwg.mxu0
  %328 = vst [vmem:[%s3] sm:$0xff] %v266
  %329 = vst [vmem:[%s3 + $0x8] sm:$0xff] %v269
  %330 = vst [vmem:[%s3 + $0x10] sm:$0xff] %v274
  %331 = vst [vmem:[%s3 + $0x18] sm:$0xff] %v277
  %332 = vst [vmem:[%s3 + $0x20] sm:$0xff] %v282
  %333 = vst [vmem:[%s3 + $0x28] sm:$0xff] %v285
  %334 = vst [vmem:[%s3 + $0x30] sm:$0xff] %v290
  %335 = vst [vmem:[%s3 + $0x38] sm:$0xff] %v293
  %336 = vst [vmem:[%s3 + $0x40] sm:$0xff] %v298
  %337 = vst [vmem:[%s3 + $0x48] sm:$0xff] %v301
  %338 = vst [vmem:[%s3 + $0x50] sm:$0xff] %v306
  %339 = vst [vmem:[%s3 + $0x58] sm:$0xff] %v309
  %340 = vst [vmem:[%s3 + $0x60] sm:$0xff] %v314
  %341 = vst [vmem:[%s3 + $0x68] sm:$0xff] %v317
  %342 = vst [vmem:[%s3 + $0x70] sm:$0xff] %v322
  %343 = vst [vmem:[%s3 + $0x78] sm:$0xff] %v325
  // Predicated region
  $region14: #{_lambda_.23} parent=0 // pred_check
    _
  $region15: #{_lambda_.23} parent=0 // pred_check_branch
    %345 = sbr.rel (0) target = $region17
  $region16: #{_lambda_.23} parent=0 // pred_region
    _
  $region17: #{_lambda_.23} parent=0 // pred_fallthru
    _
  // Predicated region
  $region18: #{_lambda_.23} parent=0 // pred_check
    _
  $region19: #{_lambda_.23} parent=0 // pred_check_branch
    %347 = sbr.rel (0) target = $region21
  $region20: #{_lambda_.23} parent=0 // pred_region
    _
  $region21: #{_lambda_.23} parent=0 // pred_fallthru
    _

</llo_original>
